<compile_context>
chip_gen: v7x
topology: tpu7x:2x2x1
jax: 0.10.0
libtpu: 0.0.40
codegen_flags: <defaults>
</compile_context>

<pallas_src>
import numpy as np

import jax
import jax.numpy as jnp
from jax.experimental import pallas as pl
from jax.experimental.pallas import tpu as pltpu

MAX_LEVELS = 3
KSIZES = (3, 5, 7)           # gauss_kernels built in LapLoss2.__init__
SIGMA = 2.0


def _gaussian_1d(k: int, sigma: float) -> np.ndarray:
    # The torch 2-D kernel exp(-((x-m)^2+(y-m)^2)/(2 s^2)) / sum factorizes
    # exactly into an outer product of these normalized 1-D Gaussians, so the
    # separable form is numerically equivalent.
    ax = np.arange(k, dtype=np.float64)
    m = (k - 1) / 2.0
    u = np.exp(-((ax - m) ** 2) / (2.0 * float(sigma) ** 2))
    return (u / u.sum()).astype(np.float32)


_KERNELS_1D = [_gaussian_1d(k, SIGMA) for k in KSIZES]


def _round_up(x: int, m: int) -> int:
    return ((x + m - 1) // m) * m


def _blur_matrices(H: int, W: int, Wp: int):
    """Banded matrices implementing the zero-padded 'same' Gaussian convs.

    cmat: (W, 3*Wp)          x @ cmat  -> horizontal blur; level k occupies the
                             128-aligned column block [k*Wp, k*Wp + W).
    vmat: (MAX_LEVELS, H, H) vmat[k] @ x -> vertical blur for level k.
    Out-of-range taps are simply absent (zero rows/cols), which reproduces
    nn.Conv2d's zero padding exactly.
    """
    cmat = np.zeros((W, MAX_LEVELS * Wp), np.float32)
    vmat = np.zeros((MAX_LEVELS, H, H), np.float32)
    for lvl, (k, w1) in enumerate(zip(KSIZES, _KERNELS_1D)):
        p = k // 2
        for j in range(W):                                     # output column
            for c in range(max(0, j - p), min(W, j + p + 1)):  # input column
                cmat[c, lvl * Wp + j] = w1[c - j + p]
        for i in range(H):                                     # output row
            for r in range(max(0, i - p), min(H, i + p + 1)):  # input row
                vmat[lvl, i, r] = w1[r - i + p]
        # Static sanity check (review concern): interior columns must sum to 1
        # (full normalized band); boundary columns hold the zero-padded tails.
        if W > 2 * p:
            interior = cmat[:, lvl * Wp + p:lvl * Wp + W - p].sum(axis=0)
            assert np.allclose(interior, 1.0, atol=1e-6), "bad blur matrix"
    return cmat, vmat


def _vmem_limit_bytes() -> int:
    try:
        phys = int(pltpu.get_tpu_info().vmem_capacity_bytes)
    except Exception:
        phys = 64 * 1024 * 1024          # conservative (v7x-sized) fallback
    # ~3/4 of physical, capped at 64 MiB: 64 MiB on v5e/v6e (128 MiB physical),
    # 48 MiB on v7x (64 MiB physical per TensorCore).
    return int(min(phys * 3 // 4, 64 * 1024 * 1024))


def _pick_batch_block(N: int, H: int, W: int, Wp: int, vmem_limit: int) -> int:
    """Images per grid step: ~1 MiB input blocks, divisor of N, G >= 2."""
    img_bytes = H * W * 4
    # Constants (double-buffered by the pipeline) + roughly 30 block-sized live
    # temporaries (3 inputs x 2 buffers, 3 level-stacked horizontal blurs,
    # vertical blur / residual temporaries, broadcast V matrix).
    const_bytes = (W * MAX_LEVELS * Wp + MAX_LEVELS * H * H) * 4 * 2
    budget = min(1 << 20, (int(vmem_limit * 0.8) - const_bytes) // 30)
    budget = max(img_bytes, budget)
    cap = max(1, budget // img_bytes)
    if N >= 2:
        cap = min(cap, N // 2)           # keep G >= 2 for megacore balance
    cap = max(1, cap)
    for d in range(cap, 0, -1):          # largest divisor of N that fits
        if N % d == 0:
            return d
    return 1


def _make_kernel(H: int, W: int, Wp: int, NB: int):
    """Kernel factory closing over the static dims."""

    def kernel(inp_ref, ir_ref, vis_ref, cmat_ref, vmat_ref, out_ref):
        # inp/ir/vis: (NB, H, W) f32.  cmat: (W, 3*Wp).  vmat: (3, H, H).
        # out: (1, MAX_LEVELS, W) f32 per-level, per-lane partial sums.
        cmat = cmat_ref[...]
        xs = [inp_ref[...], ir_ref[...], vis_ref[...]]

        # Horizontal blur of all three levels for each input: one MXU matmul.
        # (The reshape only merges leading dims, no relayout.)
        hbs = [
            jnp.dot(x.reshape(NB * H, W), cmat,
                    preferred_element_type=jnp.float32
                    ).reshape(NB, H, MAX_LEVELS * Wp)
            for x in xs
        ]

        rows = []
        for lvl in range(MAX_LEVELS):
            # Vertical blur: batched MXU matmul (leading batch dim, contract H).
            v_b = jnp.broadcast_to(vmat_ref[lvl], (NB, H, H))
            res = []
            for x, hb in zip(xs, hbs):
                hb_l = hb[:, :, lvl * Wp:(lvl + 1) * Wp]     # 128-aligned slice
                blur = jax.lax.dot_general(
                    v_b, hb_l,
                    dimension_numbers=(((2,), (1,)), ((0,), (0,))),
                    preferred_element_type=jnp.float32)      # (NB, H, Wp)
                res.append(x - blur[:, :, :W])               # Laplacian residual
            d_in, d_ir, d_vis = res
            t = jnp.abs(d_in - jnp.maximum(d_ir, d_vis))     # (NB, H, W)
            # Keep the lane axis dense; sum batch + rows only.
            rows.append(jnp.sum(t.reshape(NB * H, W), axis=0, keepdims=True))

        out_ref[...] = jnp.concatenate(rows, axis=0)[None]   # (1, 3, W)

    return kernel


@jax.jit
def lap_loss2(inp, ir, vis):
    """Forward pass of LapLoss2 (max_levels=3, channels=1). Inputs are NCHW."""
    B, C, H, W = inp.shape
    N = B * C
    Wp = _round_up(W, 128)

    vmem_limit = _vmem_limit_bytes()
    NB = _pick_batch_block(N, H, W, Wp, vmem_limit)
    G = N // NB

    cmat_np, vmat_np = _blur_matrices(H, W, Wp)
    cmat = jnp.asarray(cmat_np)
    vmat = jnp.asarray(vmat_np)

    def prep(x):   # free: merges (B, C) -> N; no pad / transpose / HBM rewrite
        return x.reshape(N, H, W).astype(jnp.float32)

    xi, xr, xv = prep(inp), prep(ir), prep(vis)

    img_spec = pl.BlockSpec((NB, H, W), lambda n: (n, 0, 0))
    cmat_spec = pl.BlockSpec((W, MAX_LEVELS * Wp), lambda n: (0, 0))
    vmat_spec = pl.BlockSpec((MAX_LEVELS, H, H), lambda n: (0, 0, 0))
    out_spec = pl.BlockSpec((1, MAX_LEVELS, W), lambda n: (n, 0, 0))

    # TODO(synk): for very large images (single image block >> 1 MiB) add a
    # row-tile grid axis (the vertical blur matrix then needs halo rows);
    # batch tiling alone covers typical training crop sizes.  Input
    # pipeline_mode=pl.Buffered(3) is a further sweep knob once DMA is exposed.
    partial = pl.pallas_call(
        _make_kernel(H, W, Wp, NB),
        out_shape=jax.ShapeDtypeStruct((G, MAX_LEVELS, W), jnp.float32),
        grid=(G,),
        in_specs=[img_spec, img_spec, img_spec, cmat_spec, vmat_spec],
        out_specs=out_spec,
        compiler_params=pltpu.CompilerParams(
            dimension_semantics=("parallel",),
            vmem_limit_bytes=vmem_limit,
        ),
    )(xi, xr, xv, cmat, vmat)

    level_sums = jnp.sum(partial, axis=(0, 2))               # (MAX_LEVELS,)
    means = level_sums / jnp.float32(B * C * H * W)          # F.l1_loss 'mean'
    # 10 * (level0 + level1) + level2
    return 10.0 * (means[0] + means[1]) + means[2]


def _lap_loss2_reference(inp, ir, vis):
    """Pure-JAX (non-Pallas) reference mirroring the PyTorch module."""
    B, C, H, W = inp.shape
    x_in = inp.astype(jnp.float32)
    x_ir = ir.astype(jnp.float32)
    x_vis = vis.astype(jnp.float32)

    def blur2d(x, k, w2):
        p = k // 2
        xp = jnp.pad(x, ((0, 0), (0, 0), (p, p), (p, p)))
        acc = jnp.zeros_like(x)
        for i in range(k):
            for j in range(k):
                acc = acc + float(w2[i, j]) * xp[:, :, i:i + H, j:j + W]
        return acc

    loss = jnp.float32(0.0)
    for lvl, k in enumerate(KSIZES):
        w1 = _KERNELS_1D[lvl]
        w2 = np.outer(w1, w1)
        d_in = x_in - blur2d(x_in, k, w2)
        d_ir = x_ir - blur2d(x_ir, k, w2)
        d_vis = x_vis - blur2d(x_vis, k, w2)
        l1 = jnp.mean(jnp.abs(d_in - jnp.maximum(d_ir, d_vis)))
        loss = loss + (10.0 if lvl < MAX_LEVELS - 1 else 1.0) * l1
    return loss


if __name__ == "__main__":
    key = jax.random.PRNGKey(0)
    k1, k2, k3 = jax.random.split(key, 3)
    shape = (2, 1, 16, 16)  # B=2, C=1 (LapLoss2 default channels=1), 16x16 spatial
    inp = jax.random.uniform(k1, shape, dtype=jnp.float32)
    ir = jax.random.uniform(k2, shape, dtype=jnp.float32)
    vis = jax.random.uniform(k3, shape, dtype=jnp.float32)

    loss = lap_loss2(inp, ir, vis)
    jax.block_until_ready(loss)

    ref = _lap_loss2_reference(inp, ir, vis)
    jax.block_until_ready(ref)
    # Tolerance allows for possible reduced-precision MXU passes in the blur
    # matmuls (review correctness concern); any real indexing/weight bug moves
    # the loss by far more than this.
    if not np.allclose(np.asarray(loss), np.asarray(ref), rtol=5e-3, atol=1e-4):
        raise AssertionError(f"mismatch: pallas={float(loss)} ref={float(ref)}")

    print("KERNEL_OK")
</pallas_src>

<mosaic_0001>
module attributes {stable_mosaic.version = 11 : i64} {
  func.func @kernel(%arg0: i32, %arg1: memref<1x16x16xf32, #tpu.memory_space<vmem>>, %arg2: memref<1x16x16xf32, #tpu.memory_space<vmem>>, %arg3: memref<1x16x16xf32, #tpu.memory_space<vmem>>, %arg4: memref<16x384xf32, #tpu.memory_space<vmem>>, %arg5: memref<3x16x16xf32, #tpu.memory_space<vmem>>, %arg6: memref<1x3x16xf32, #tpu.memory_space<vmem>>) attributes {dimension_semantics = [#tpu.dimension_semantics<parallel>], iteration_bounds = array<i64: 2>, scalar_prefetch = 0 : i64, scratch_operands = 0 : i64, tpu.core_type = #tpu.core_type<tc>, window_params = [{transform_indices = @transform_0, window_bounds = array<i64: 1, 16, 16>}, {transform_indices = @transform_1, window_bounds = array<i64: 1, 16, 16>}, {transform_indices = @transform_2, window_bounds = array<i64: 1, 16, 16>}, {pipeline_mode = #tpu.pipeline_mode<synchronous>, transform_indices = @transform_3, window_bounds = array<i64: 16, 384>}, {pipeline_mode = #tpu.pipeline_mode<synchronous>, transform_indices = @transform_4, window_bounds = array<i64: 3, 16, 16>}, {transform_indices = @transform_5, window_bounds = array<i64: 1, 3, 16>}]} {
    %c0 = arith.constant 0 : index
    %c0_0 = arith.constant 0 : index
    %0 = vector.load %arg4[%c0, %c0_0] : memref<16x384xf32, #tpu.memory_space<vmem>>, vector<16x384xf32>
    %c0_1 = arith.constant 0 : index
    %c0_2 = arith.constant 0 : index
    %c0_3 = arith.constant 0 : index
    %1 = vector.load %arg1[%c0_1, %c0_2, %c0_3] : memref<1x16x16xf32, #tpu.memory_space<vmem>>, vector<1x16x16xf32>
    %c0_4 = arith.constant 0 : index
    %c0_5 = arith.constant 0 : index
    %c0_6 = arith.constant 0 : index
    %2 = vector.load %arg2[%c0_4, %c0_5, %c0_6] : memref<1x16x16xf32, #tpu.memory_space<vmem>>, vector<1x16x16xf32>
    %c0_7 = arith.constant 0 : index
    %c0_8 = arith.constant 0 : index
    %c0_9 = arith.constant 0 : index
    %3 = vector.load %arg3[%c0_7, %c0_8, %c0_9] : memref<1x16x16xf32, #tpu.memory_space<vmem>>, vector<1x16x16xf32>
    %4 = vector.shape_cast %1 : vector<1x16x16xf32> to vector<16x16xf32>
    %cst = arith.constant dense<0.000000e+00> : vector<16x384xf32>
    %5 = tpu.matmul %4, %0, %cst {dimension_numbers = #tpu.dot_dimension_numbers<[1], [0], [0], [1], [0, 0, 1, 1], [], []>} : vector<16x16xf32>, vector<16x384xf32>, vector<16x384xf32> -> vector<16x384xf32>
    %6 = vector.shape_cast %5 : vector<16x384xf32> to vector<1x16x384xf32>
    %7 = vector.shape_cast %2 : vector<1x16x16xf32> to vector<16x16xf32>
    %cst_10 = arith.constant dense<0.000000e+00> : vector<16x384xf32>
    %8 = tpu.matmul %7, %0, %cst_10 {dimension_numbers = #tpu.dot_dimension_numbers<[1], [0], [0], [1], [0, 0, 1, 1], [], []>} : vector<16x16xf32>, vector<16x384xf32>, vector<16x384xf32> -> vector<16x384xf32>
    %9 = vector.shape_cast %8 : vector<16x384xf32> to vector<1x16x384xf32>
    %10 = vector.shape_cast %3 : vector<1x16x16xf32> to vector<16x16xf32>
    %cst_11 = arith.constant dense<0.000000e+00> : vector<16x384xf32>
    %11 = tpu.matmul %10, %0, %cst_11 {dimension_numbers = #tpu.dot_dimension_numbers<[1], [0], [0], [1], [0, 0, 1, 1], [], []>} : vector<16x16xf32>, vector<16x384xf32>, vector<16x384xf32> -> vector<16x384xf32>
    %12 = vector.shape_cast %11 : vector<16x384xf32> to vector<1x16x384xf32>
    %c0_12 = arith.constant 0 : index
    %c0_13 = arith.constant 0 : index
    %c0_14 = arith.constant 0 : index
    %13 = vector.load %arg5[%c0_12, %c0_13, %c0_14] : memref<3x16x16xf32, #tpu.memory_space<vmem>>, vector<1x16x16xf32>
    %14 = vector.shape_cast %13 : vector<1x16x16xf32> to vector<16x16xf32>
    %15 = vector.shape_cast %14 : vector<16x16xf32> to vector<1x16x16xf32>
    %16 = vector.extract_strided_slice %6 {offsets = [0, 0, 0], sizes = [1, 16, 128], strides = [1, 1, 1]} : vector<1x16x384xf32> to vector<1x16x128xf32>
    %cst_15 = arith.constant dense<0.000000e+00> : vector<1x16x128xf32>
    %17 = tpu.matmul %15, %16, %cst_15 {dimension_numbers = #tpu.dot_dimension_numbers<[2], [1], [1], [2], [0, 0, 0, 1, 1, 2], [0], [0]>} : vector<1x16x16xf32>, vector<1x16x128xf32>, vector<1x16x128xf32> -> vector<1x16x128xf32>
    %18 = vector.extract_strided_slice %17 {offsets = [0, 0, 0], sizes = [1, 16, 16], strides = [1, 1, 1]} : vector<1x16x128xf32> to vector<1x16x16xf32>
    %19 = arith.subf %1, %18 : vector<1x16x16xf32>
    %20 = vector.extract_strided_slice %9 {offsets = [0, 0, 0], sizes = [1, 16, 128], strides = [1, 1, 1]} : vector<1x16x384xf32> to vector<1x16x128xf32>
    %cst_16 = arith.constant dense<0.000000e+00> : vector<1x16x128xf32>
    %21 = tpu.matmul %15, %20, %cst_16 {dimension_numbers = #tpu.dot_dimension_numbers<[2], [1], [1], [2], [0, 0, 0, 1, 1, 2], [0], [0]>} : vector<1x16x16xf32>, vector<1x16x128xf32>, vector<1x16x128xf32> -> vector<1x16x128xf32>
    %22 = vector.extract_strided_slice %21 {offsets = [0, 0, 0], sizes = [1, 16, 16], strides = [1, 1, 1]} : vector<1x16x128xf32> to vector<1x16x16xf32>
    %23 = arith.subf %2, %22 : vector<1x16x16xf32>
    %24 = vector.extract_strided_slice %12 {offsets = [0, 0, 0], sizes = [1, 16, 128], strides = [1, 1, 1]} : vector<1x16x384xf32> to vector<1x16x128xf32>
    %cst_17 = arith.constant dense<0.000000e+00> : vector<1x16x128xf32>
    %25 = tpu.matmul %15, %24, %cst_17 {dimension_numbers = #tpu.dot_dimension_numbers<[2], [1], [1], [2], [0, 0, 0, 1, 1, 2], [0], [0]>} : vector<1x16x16xf32>, vector<1x16x128xf32>, vector<1x16x128xf32> -> vector<1x16x128xf32>
    %26 = vector.extract_strided_slice %25 {offsets = [0, 0, 0], sizes = [1, 16, 16], strides = [1, 1, 1]} : vector<1x16x128xf32> to vector<1x16x16xf32>
    %27 = arith.subf %3, %26 : vector<1x16x16xf32>
    %28 = arith.maximumf %23, %27 : vector<1x16x16xf32>
    %29 = arith.subf %19, %28 : vector<1x16x16xf32>
    %30 = math.absf %29 : vector<1x16x16xf32>
    %31 = vector.shape_cast %30 : vector<1x16x16xf32> to vector<16x16xf32>
    %cst_18 = arith.constant dense<0.000000e+00> : vector<16xf32>
    %32 = vector.multi_reduction <add>, %31, %cst_18 [0] : vector<16x16xf32> to vector<16xf32>
    %33 = vector.shape_cast %32 : vector<16xf32> to vector<1x16xf32>
    %c1 = arith.constant 1 : index
    %c0_19 = arith.constant 0 : index
    %c0_20 = arith.constant 0 : index
    %34 = vector.load %arg5[%c1, %c0_19, %c0_20] : memref<3x16x16xf32, #tpu.memory_space<vmem>>, vector<1x16x16xf32>
    %35 = vector.shape_cast %34 : vector<1x16x16xf32> to vector<16x16xf32>
    %36 = vector.shape_cast %35 : vector<16x16xf32> to vector<1x16x16xf32>
    %37 = vector.extract_strided_slice %6 {offsets = [0, 0, 128], sizes = [1, 16, 128], strides = [1, 1, 1]} : vector<1x16x384xf32> to vector<1x16x128xf32>
    %cst_21 = arith.constant dense<0.000000e+00> : vector<1x16x128xf32>
    %38 = tpu.matmul %36, %37, %cst_21 {dimension_numbers = #tpu.dot_dimension_numbers<[2], [1], [1], [2], [0, 0, 0, 1, 1, 2], [0], [0]>} : vector<1x16x16xf32>, vector<1x16x128xf32>, vector<1x16x128xf32> -> vector<1x16x128xf32>
    %39 = vector.extract_strided_slice %38 {offsets = [0, 0, 0], sizes = [1, 16, 16], strides = [1, 1, 1]} : vector<1x16x128xf32> to vector<1x16x16xf32>
    %40 = arith.subf %1, %39 : vector<1x16x16xf32>
    %41 = vector.extract_strided_slice %9 {offsets = [0, 0, 128], sizes = [1, 16, 128], strides = [1, 1, 1]} : vector<1x16x384xf32> to vector<1x16x128xf32>
    %cst_22 = arith.constant dense<0.000000e+00> : vector<1x16x128xf32>
    %42 = tpu.matmul %36, %41, %cst_22 {dimension_numbers = #tpu.dot_dimension_numbers<[2], [1], [1], [2], [0, 0, 0, 1, 1, 2], [0], [0]>} : vector<1x16x16xf32>, vector<1x16x128xf32>, vector<1x16x128xf32> -> vector<1x16x128xf32>
    %43 = vector.extract_strided_slice %42 {offsets = [0, 0, 0], sizes = [1, 16, 16], strides = [1, 1, 1]} : vector<1x16x128xf32> to vector<1x16x16xf32>
    %44 = arith.subf %2, %43 : vector<1x16x16xf32>
    %45 = vector.extract_strided_slice %12 {offsets = [0, 0, 128], sizes = [1, 16, 128], strides = [1, 1, 1]} : vector<1x16x384xf32> to vector<1x16x128xf32>
    %cst_23 = arith.constant dense<0.000000e+00> : vector<1x16x128xf32>
    %46 = tpu.matmul %36, %45, %cst_23 {dimension_numbers = #tpu.dot_dimension_numbers<[2], [1], [1], [2], [0, 0, 0, 1, 1, 2], [0], [0]>} : vector<1x16x16xf32>, vector<1x16x128xf32>, vector<1x16x128xf32> -> vector<1x16x128xf32>
    %47 = vector.extract_strided_slice %46 {offsets = [0, 0, 0], sizes = [1, 16, 16], strides = [1, 1, 1]} : vector<1x16x128xf32> to vector<1x16x16xf32>
    %48 = arith.subf %3, %47 : vector<1x16x16xf32>
    %49 = arith.maximumf %44, %48 : vector<1x16x16xf32>
    %50 = arith.subf %40, %49 : vector<1x16x16xf32>
    %51 = math.absf %50 : vector<1x16x16xf32>
    %52 = vector.shape_cast %51 : vector<1x16x16xf32> to vector<16x16xf32>
    %cst_24 = arith.constant dense<0.000000e+00> : vector<16xf32>
    %53 = vector.multi_reduction <add>, %52, %cst_24 [0] : vector<16x16xf32> to vector<16xf32>
    %54 = vector.shape_cast %53 : vector<16xf32> to vector<1x16xf32>
    %c2 = arith.constant 2 : index
    %c0_25 = arith.constant 0 : index
    %c0_26 = arith.constant 0 : index
    %55 = vector.load %arg5[%c2, %c0_25, %c0_26] : memref<3x16x16xf32, #tpu.memory_space<vmem>>, vector<1x16x16xf32>
    %56 = vector.shape_cast %55 : vector<1x16x16xf32> to vector<16x16xf32>
    %57 = vector.shape_cast %56 : vector<16x16xf32> to vector<1x16x16xf32>
    %58 = vector.extract_strided_slice %6 {offsets = [0, 0, 256], sizes = [1, 16, 128], strides = [1, 1, 1]} : vector<1x16x384xf32> to vector<1x16x128xf32>
    %cst_27 = arith.constant dense<0.000000e+00> : vector<1x16x128xf32>
    %59 = tpu.matmul %57, %58, %cst_27 {dimension_numbers = #tpu.dot_dimension_numbers<[2], [1], [1], [2], [0, 0, 0, 1, 1, 2], [0], [0]>} : vector<1x16x16xf32>, vector<1x16x128xf32>, vector<1x16x128xf32> -> vector<1x16x128xf32>
    %60 = vector.extract_strided_slice %59 {offsets = [0, 0, 0], sizes = [1, 16, 16], strides = [1, 1, 1]} : vector<1x16x128xf32> to vector<1x16x16xf32>
    %61 = arith.subf %1, %60 : vector<1x16x16xf32>
    %62 = vector.extract_strided_slice %9 {offsets = [0, 0, 256], sizes = [1, 16, 128], strides = [1, 1, 1]} : vector<1x16x384xf32> to vector<1x16x128xf32>
    %cst_28 = arith.constant dense<0.000000e+00> : vector<1x16x128xf32>
    %63 = tpu.matmul %57, %62, %cst_28 {dimension_numbers = #tpu.dot_dimension_numbers<[2], [1], [1], [2], [0, 0, 0, 1, 1, 2], [0], [0]>} : vector<1x16x16xf32>, vector<1x16x128xf32>, vector<1x16x128xf32> -> vector<1x16x128xf32>
    %64 = vector.extract_strided_slice %63 {offsets = [0, 0, 0], sizes = [1, 16, 16], strides = [1, 1, 1]} : vector<1x16x128xf32> to vector<1x16x16xf32>
    %65 = arith.subf %2, %64 : vector<1x16x16xf32>
    %66 = vector.extract_strided_slice %12 {offsets = [0, 0, 256], sizes = [1, 16, 128], strides = [1, 1, 1]} : vector<1x16x384xf32> to vector<1x16x128xf32>
    %cst_29 = arith.constant dense<0.000000e+00> : vector<1x16x128xf32>
    %67 = tpu.matmul %57, %66, %cst_29 {dimension_numbers = #tpu.dot_dimension_numbers<[2], [1], [1], [2], [0, 0, 0, 1, 1, 2], [0], [0]>} : vector<1x16x16xf32>, vector<1x16x128xf32>, vector<1x16x128xf32> -> vector<1x16x128xf32>
    %68 = vector.extract_strided_slice %67 {offsets = [0, 0, 0], sizes = [1, 16, 16], strides = [1, 1, 1]} : vector<1x16x128xf32> to vector<1x16x16xf32>
    %69 = arith.subf %3, %68 : vector<1x16x16xf32>
    %70 = arith.maximumf %65, %69 : vector<1x16x16xf32>
    %71 = arith.subf %61, %70 : vector<1x16x16xf32>
    %72 = math.absf %71 : vector<1x16x16xf32>
    %73 = vector.shape_cast %72 : vector<1x16x16xf32> to vector<16x16xf32>
    %cst_30 = arith.constant dense<0.000000e+00> : vector<16xf32>
    %74 = vector.multi_reduction <add>, %73, %cst_30 [0] : vector<16x16xf32> to vector<16xf32>
    %75 = vector.shape_cast %74 : vector<16xf32> to vector<1x16xf32>
    %76 = tpu.concatenate %33, %54, %75 in 0 : vector<1x16xf32>, vector<1x16xf32>, vector<1x16xf32> -> vector<3x16xf32>
    %77 = vector.shape_cast %76 : vector<3x16xf32> to vector<1x3x16xf32>
    %c0_31 = arith.constant 0 : index
    %c0_32 = arith.constant 0 : index
    %c0_33 = arith.constant 0 : index
    %78 = vector.load %arg6[%c0_31, %c0_32, %c0_33] : memref<1x3x16xf32, #tpu.memory_space<vmem>>, vector<1x3x16xf32>
    tpu.vector_store %arg6[%c0_31, %c0_32, %c0_33], %77 {strides = array<i32>} : memref<1x3x16xf32, #tpu.memory_space<vmem>>, vector<1x3x16xf32>,
    return
  }
  func.func @transform_0(%arg0: i32) -> (i32, i32, i32) {
    %c0_i32 = arith.constant 0 : i32
    %c0_i32_0 = arith.constant 0 : i32
    %c0_i32_1 = arith.constant 0 : i32
    return %arg0, %c0_i32, %c0_i32_0 : i32, i32, i32
  }
  func.func @transform_1(%arg0: i32) -> (i32, i32, i32) {
    %c0_i32 = arith.constant 0 : i32
    %c0_i32_0 = arith.constant 0 : i32
    %c0_i32_1 = arith.constant 0 : i32
    return %arg0, %c0_i32, %c0_i32_0 : i32, i32, i32
  }
  func.func @transform_2(%arg0: i32) -> (i32, i32, i32) {
    %c0_i32 = arith.constant 0 : i32
    %c0_i32_0 = arith.constant 0 : i32
    %c0_i32_1 = arith.constant 0 : i32
    return %arg0, %c0_i32, %c0_i32_0 : i32, i32, i32
  }
  func.func @transform_3(%arg0: i32) -> (i32, i32) {
    %c0_i32 = arith.constant 0 : i32
    %c0_i32_0 = arith.constant 0 : i32
    %c0_i32_1 = arith.constant 0 : i32
    return %c0_i32, %c0_i32_0 : i32, i32
  }
  func.func @transform_4(%arg0: i32) -> (i32, i32, i32) {
    %c0_i32 = arith.constant 0 : i32
    %c0_i32_0 = arith.constant 0 : i32
    %c0_i32_1 = arith.constant 0 : i32
    %c0_i32_2 = arith.constant 0 : i32
    return %c0_i32, %c0_i32_0, %c0_i32_1 : i32, i32, i32
  }
  func.func @transform_5(%arg0: i32) -> (i32, i32, i32) {
    %c0_i32 = arith.constant 0 : i32
    %c0_i32_0 = arith.constant 0 : i32
    %c0_i32_1 = arith.constant 0 : i32
    return %arg0, %c0_i32, %c0_i32_0 : i32, i32, i32
  }
}

</mosaic_0001>

<llo_original>
// kernel: lap_loss2.1
$region0: #{lap_loss2.1}
  #allocation0 [shape = 'u32[]', space=smem, size = 0x4, offset = 0x4, fixed_abs, tag = 'smem constant byte address 0x4 - core index']
  #allocation1 [shape = 'u32[144,128]{1,0:T(1,128)}', space=vmem, size = 0x12000, scoped, tag = 'internal scratch']
  %s0 = inlined_call_operand.hbm [shape: f32[2,16,16], index: 0, kind: input, shape index: {}]
  %s1 = inlined_call_operand.hbm [shape: f32[2,16,16], index: 1, kind: input, shape index: {}]
  %s2 = inlined_call_operand.hbm [shape: f32[2,16,16], index: 2, kind: input, shape index: {}]
  %s3 = inlined_call_operand.hbm [shape: f32[16,384], index: 3, kind: input, shape index: {}]
  %s4 = inlined_call_operand.hbm [shape: f32[3,16,16], index: 4, kind: input, shape index: {}]
  %s5 = inlined_call_operand.vmem [shape: f32[2,3,16], index: 5, kind: output, shape index: {}]
  %s6 = sld [smem:[#allocation0]]
  $region73: #{lap_loss2.1} parent=0
    _
  %s8 = ssub.s32 1, %s6
  %s9 = scalar_select 0, %s8, %s6
  $region1: #{lap_loss2.1} parent=0
    #allocation2 [shape = 'u8[16384]{0}', space=vmem, size = 0x4000, scoped, tag = 'input window, operand 0']
    #allocation3 [shape = 's32[2]{0}', space=sflag, size = 0x8, scoped, tag = 'scoped memory for lap_loss2.1']
    #allocation4 [shape = 'u8[16384]{0}', space=vmem, size = 0x4000, scoped, tag = 'input window, operand 1']
    #allocation5 [shape = 's32[2]{0}', space=sflag, size = 0x8, scoped, tag = 'scoped memory for lap_loss2.1']
    #allocation6 [shape = 'u8[16384]{0}', space=vmem, size = 0x4000, scoped, tag = 'input window, operand 2']
    #allocation7 [shape = 'u8[24576]{0}', space=vmem, size = 0x6000, scoped, tag = 'input window, operand 3, single buffered']
    #allocation8 [shape = 's32[1]{0}', space=sflag, size = 0x4, scoped, tag = 'scoped memory for lap_loss2.1']
    #allocation9 [shape = 'u8[24576]{0}', space=vmem, size = 0x6000, scoped, tag = 'input window, operand 4, single buffered']
    %10 = vsyncpa [#allocation3], 0
    %s11 = scalar_lea.sflag [#allocation3], 1
    %12 = vsyncpa %s11, 0
    %13 = vsyncpa [#allocation5], 0
    %s14 = scalar_lea.sflag [#allocation5], 1
    %15 = vsyncpa %s14, 0
    %16 = vsyncpa [#allocation8], 0
    loop: start=0, step=1, limit=4
    $region2: #{lap_loss2.1} parent=1 // loop_pre_header
      _
    $region3: #{lap_loss2.1} parent=1 // loop_header
      %s18 = sphi 0, %s22
      %p19 = scmp.ge.s32.totalorder %s18, 4
      %s28 = sphi 0, %s30
      %s31 = sphi 0, %s28
      %s32 = sphi 0, %s31
      %s48 = sphi 0, %s32
      %s54 = sphi 0, %s56
      %s57 = sphi 0, %s54
      %s58 = sphi 0, %s57
      %s74 = sphi 0, %s58
      %s80 = sphi 0, %s82
      %s83 = sphi 0, %s80
      %s84 = sphi 0, %s83
      %s100 = sphi 0, %s84
      %s104 = sphi 0, %s104
      %s106 = sphi 0, %s104
      %s107 = sphi 0, %s106
      %s121 = sphi 0, %s107
      %s125 = sphi 0, %s125
      %s127 = sphi 0, %s125
      %s128 = sphi 0, %s127
      %s142 = sphi 0, %s128
      %s148 = sphi 0, %s150
      %s151 = sphi 0, %s148
      %s152 = sphi 0, %s151
      %s168 = sphi 0, %s152
    $region4: #{lap_loss2.1} parent=1 // loop_header_branch
      %21 = sbr.rel (%p19) target = $region8
    $region5: #{lap_loss2.1} parent=1 // loop_body
      %s23 = ssub.s32 %s18, 1
      %s24 = ssub.s32 %s18, 2
      %s25 = sadd.s32 %s18, 1
      %s26 = ssub.s32 %s18, %s25
      %p27 = scmp.eq.s32.totalorder %s26, 0
      %s29 = sadd.s32 %s28, 1
      %s30 = scalar_select %p27, %s28, %s29
      %p33 = pneg %p27
      %p34 = scmp.eq.s32.totalorder %s18, 1
      %p35 = por %p33, %p34
      %p36 = scmp.ne.s32.totalorder %s28, %s31
      %p37 = scmp.eq.s32.totalorder %s18, 0
      %p38 = por %p36, %p37
      %p39 = scmp.ne.s32.totalorder %s28, %s31
      %p40 = scmp.eq.s32.totalorder %s23, 1
      %p41 = por %p39, %p40
      %p42 = scmp.ne.s32.totalorder %s31, %s32
      %p43 = scmp.eq.s32.totalorder %s23, 0
      %p44 = por %p42, %p43
      %p45 = scmp.ne.s32.totalorder %s31, %s32
      %p46 = scmp.eq.s32.totalorder %s24, 1
      %p47 = por %p45, %p46
      %p49 = scmp.ne.s32.totalorder %s32, %s48
      %p50 = scmp.eq.s32.totalorder %s24, 0
      %p51 = por %p49, %p50
      %s52 = ssub.s32 %s18, %s25
      %p53 = scmp.eq.s32.totalorder %s52, 0
      %s55 = sadd.s32 %s54, 1
      %s56 = scalar_select %p53, %s54, %s55
      %p59 = pneg %p53
      %p60 = scmp.eq.s32.totalorder %s18, 1
      %p61 = por %p59, %p60
      %p62 = scmp.ne.s32.totalorder %s54, %s57
      %p63 = scmp.eq.s32.totalorder %s18, 0
      %p64 = por %p62, %p63
      %p65 = scmp.ne.s32.totalorder %s54, %s57
      %p66 = scmp.eq.s32.totalorder %s23, 1
      %p67 = por %p65, %p66
      %p68 = scmp.ne.s32.totalorder %s57, %s58
      %p69 = scmp.eq.s32.totalorder %s23, 0
      %p70 = por %p68, %p69
      %p71 = scmp.ne.s32.totalorder %s57, %s58
      %p72 = scmp.eq.s32.totalorder %s24, 1
      %p73 = por %p71, %p72
      %p75 = scmp.ne.s32.totalorder %s58, %s74
      %p76 = scmp.eq.s32.totalorder %s24, 0
      %p77 = por %p75, %p76
      %s78 = ssub.s32 %s18, %s25
      %p79 = scmp.eq.s32.totalorder %s78, 0
      %s81 = sadd.s32 %s80, 1
      %s82 = scalar_select %p79, %s80, %s81
      %p85 = pneg %p79
      %p86 = scmp.eq.s32.totalorder %s18, 1
      %p87 = por %p85, %p86
      %p88 = scmp.ne.s32.totalorder %s80, %s83
      %p89 = scmp.eq.s32.totalorder %s18, 0
      %p90 = por %p88, %p89
      %p91 = scmp.ne.s32.totalorder %s80, %s83
      %p92 = scmp.eq.s32.totalorder %s23, 1
      %p93 = por %p91, %p92
      %p94 = scmp.ne.s32.totalorder %s83, %s84
      %p95 = scmp.eq.s32.totalorder %s23, 0
      %p96 = por %p94, %p95
      %p97 = scmp.ne.s32.totalorder %s83, %s84
      %p98 = scmp.eq.s32.totalorder %s24, 1
      %p99 = por %p97, %p98
      %p101 = scmp.ne.s32.totalorder %s84, %s100
      %p102 = scmp.eq.s32.totalorder %s24, 0
      %p103 = por %p101, %p102
      %s105 = sadd.s32 %s104, 1
      %p108 = scmp.eq.s32.totalorder %s18, 1
      %p109 = scmp.ne.s32.totalorder %s104, %s106
      %p110 = scmp.eq.s32.totalorder %s18, 0
      %p111 = por %p109, %p110
      %p112 = scmp.ne.s32.totalorder %s104, %s106
      %p113 = scmp.eq.s32.totalorder %s23, 1
      %p114 = por %p112, %p113
      %p115 = scmp.ne.s32.totalorder %s106, %s107
      %p116 = scmp.eq.s32.totalorder %s23, 0
      %p117 = por %p115, %p116
      %p118 = scmp.ne.s32.totalorder %s106, %s107
      %p119 = scmp.eq.s32.totalorder %s24, 1
      %p120 = por %p118, %p119
      %p122 = scmp.ne.s32.totalorder %s107, %s121
      %p123 = scmp.eq.s32.totalorder %s24, 0
      %p124 = por %p122, %p123
      %s126 = sadd.s32 %s125, 1
      %p129 = scmp.eq.s32.totalorder %s18, 1
      %p130 = scmp.ne.s32.totalorder %s125, %s127
      %p131 = scmp.eq.s32.totalorder %s18, 0
      %p132 = por %p130, %p131
      %p133 = scmp.ne.s32.totalorder %s125, %s127
      %p134 = scmp.eq.s32.totalorder %s23, 1
      %p135 = por %p133, %p134
      %p136 = scmp.ne.s32.totalorder %s127, %s128
      %p137 = scmp.eq.s32.totalorder %s23, 0
      %p138 = por %p136, %p137
      %p139 = scmp.ne.s32.totalorder %s127, %s128
      %p140 = scmp.eq.s32.totalorder %s24, 1
      %p141 = por %p139, %p140
      %p143 = scmp.ne.s32.totalorder %s128, %s142
      %p144 = scmp.eq.s32.totalorder %s24, 0
      %p145 = por %p143, %p144
      %s146 = ssub.s32 %s18, %s25
      %p147 = scmp.eq.s32.totalorder %s146, 0
      %s149 = sadd.s32 %s148, 1
      %s150 = scalar_select %p147, %s148, %s149
      %p153 = pneg %p147
      %p154 = scmp.eq.s32.totalorder %s18, 1
      %p155 = por %p153, %p154
      %p156 = scmp.ne.s32.totalorder %s148, %s151
      %p157 = scmp.eq.s32.totalorder %s18, 0
      %p158 = por %p156, %p157
      %p159 = scmp.ne.s32.totalorder %s148, %s151
      %p160 = scmp.eq.s32.totalorder %s23, 1
      %p161 = por %p159, %p160
      %p162 = scmp.ne.s32.totalorder %s151, %s152
      %p163 = scmp.eq.s32.totalorder %s23, 0
      %p164 = por %p162, %p163
      %p165 = scmp.ne.s32.totalorder %s151, %s152
      %p166 = scmp.eq.s32.totalorder %s24, 1
      %p167 = por %p165, %p166
      %p169 = scmp.ne.s32.totalorder %s152, %s168
      %p170 = scmp.eq.s32.totalorder %s24, 0
      %p171 = por %p169, %p170
      %p172 = scmp.le.s32.totalorder 1, %s18
      %p173 = scmp.lt.s32.totalorder %s18, 3
      %p174 = pnand %p172, %p173
      %p175 = pneg %p174
      // Predicated region
      $region9: #{lap_loss2.1} parent=5 // pred_check
        _
      $region10: #{lap_loss2.1} parent=5 // pred_check_branch
        %177 = sbr.rel (%p174) target = $region12
      $region11: #{lap_loss2.1} parent=5 // pred_region
        %s178 = ssub.s32 %s18, 1
        // Predicated region
        $region13: #{lap_loss2.1} parent=11 // pred_check
          %p179 = pneg %p117
        $region14: #{lap_loss2.1} parent=11 // pred_check_branch
          %181 = sbr.rel (%p179) target = $region16
        $region15: #{lap_loss2.1} parent=11 // pred_region
          %s183 = ssub.s32 768, 768
          %184 = vsyncadd [#allocation8], %s183
          %s185 = sshll.u32 [#allocation7], 4
          %s186 = int_to_ptr.vmem [resolvable:$true] %s185
          %191 = dma.hbm_to_vmem [thread:$0]  %s3, 768, %s186, [#allocation8], 384, 384, 24
        $region16: #{lap_loss2.1} parent=11 // pred_fallthru
          _
        // Predicated region
        $region17: #{lap_loss2.1} parent=11 // pred_check
          %p192 = pneg %p138
        $region18: #{lap_loss2.1} parent=11 // pred_check_branch
          %194 = sbr.rel (%p192) target = $region20
        $region19: #{lap_loss2.1} parent=11 // pred_region
          %s196 = ssub.s32 768, 768
          %197 = vsyncadd [#allocation8], %s196
          %s198 = sshll.u32 [#allocation9], 4
          %s199 = int_to_ptr.vmem [resolvable:$true] %s198
          %204 = dma.hbm_to_vmem [thread:$0]  %s4, 768, %s199, [#allocation8], 128, 128, 8
        $region20: #{lap_loss2.1} parent=11 // pred_fallthru
          _
      $region12: #{lap_loss2.1} parent=5 // pred_fallthru
        _
      %p205 = scmp.lt.s32.totalorder %s18, 2
      // Predicated region
      $region21: #{lap_loss2.1} parent=5 // pred_check
        %p206 = pneg %p205
      $region22: #{lap_loss2.1} parent=5 // pred_check_branch
        %208 = sbr.rel (%p206) target = $region24
      $region23: #{lap_loss2.1} parent=5 // pred_region
        // Predicated region
        $region25: #{lap_loss2.1} parent=23 // pred_check
          %p209 = pneg %p38
        $region26: #{lap_loss2.1} parent=23 // pred_check_branch
          %211 = sbr.rel (%p209) target = $region28
        $region27: #{lap_loss2.1} parent=23 // pred_region
          %s212 = sand.u32 %s28, 1
          %s213 = scalar_lea.sflag [#allocation3], %s212
          %s214 = sand.u32 %s28, 1
          %s215 = smul.addr %s214, 16
          %s216 = scalar_lea.vmem [#allocation2], %s215
          %s218 = ssub.s32 256, 256
          %219 = vsyncadd %s213, %s218
          %s220 = smul.addr %s18, 2
          %s221 = smul.addr %s220, 128
          %s222 = scalar_lea.hbm %s0, %s221
          %s223 = sshll.u32 %s216, 4
          %s224 = int_to_ptr.vmem [resolvable:$true] %s223
          %229 = dma.hbm_to_vmem [thread:$0]  %s222, 256, %s224, %s213, 128, 128, 8
        $region28: #{lap_loss2.1} parent=23 // pred_fallthru
          _
        // Predicated region
        $region29: #{lap_loss2.1} parent=23 // pred_check
          %p230 = pneg %p64
        $region30: #{lap_loss2.1} parent=23 // pred_check_branch
          %232 = sbr.rel (%p230) target = $region32
        $region31: #{lap_loss2.1} parent=23 // pred_region
          %s233 = sand.u32 %s18, 1
          %s234 = scalar_lea.sflag [#allocation5], %s233
          %s235 = sand.u32 %s54, 1
          %s236 = smul.addr %s235, 16
          %s237 = scalar_lea.vmem [#allocation4], %s236
          %s239 = ssub.s32 256, 256
          %240 = vsyncadd %s234, %s239
          %s241 = smul.addr %s18, 2
          %s242 = smul.addr %s241, 128
          %s243 = scalar_lea.hbm %s1, %s242
          %s244 = sshll.u32 %s237, 4
          %s245 = int_to_ptr.vmem [resolvable:$true] %s244
          %250 = dma.hbm_to_vmem [thread:$0]  %s243, 256, %s245, %s234, 128, 128, 8
        $region32: #{lap_loss2.1} parent=23 // pred_fallthru
          _
        // Predicated region
        $region33: #{lap_loss2.1} parent=23 // pred_check
          %p251 = pneg %p90
        $region34: #{lap_loss2.1} parent=23 // pred_check_branch
          %253 = sbr.rel (%p251) target = $region36
        $region35: #{lap_loss2.1} parent=23 // pred_region
          %s254 = sand.u32 %s18, 1
          %s255 = scalar_lea.sflag [#allocation5], %s254
          %s256 = sand.u32 %s80, 1
          %s257 = smul.addr %s256, 16
          %s258 = scalar_lea.vmem [#allocation6], %s257
          %s260 = ssub.s32 256, 256
          %261 = vsyncadd %s255, %s260
          %s262 = smul.addr %s18, 2
          %s263 = smul.addr %s262, 128
          %s264 = scalar_lea.hbm %s2, %s263
          %s265 = sshll.u32 %s258, 4
          %s266 = int_to_ptr.vmem [resolvable:$true] %s265
          %271 = dma.hbm_to_vmem [thread:$0]  %s264, 256, %s266, %s255, 128, 128, 8
        $region36: #{lap_loss2.1} parent=23 // pred_fallthru
          _
      $region24: #{lap_loss2.1} parent=5 // pred_fallthru
        _
      %p272 = scmp.le.s32.totalorder 1, %s18
      %p273 = scmp.lt.s32.totalorder %s18, 3
      %p274 = pnand %p272, %p273
      %p275 = pneg %p274
      // Predicated region
      $region37: #{lap_loss2.1} parent=5 // pred_check
        _
      $region38: #{lap_loss2.1} parent=5 // pred_check_branch
        %277 = sbr.rel (%p274) target = $region40
      $region39: #{lap_loss2.1} parent=5 // pred_region
        %s278 = ssub.s32 %s18, 1
        %s279 = sand.u32 %s31, 1
        %s280 = scalar_lea.sflag [#allocation3], %s279
        %s281 = sand.u32 %s31, 1
        %s282 = smul.addr %s281, 16
        %s283 = scalar_lea.vmem [#allocation2], %s282
        // Predicated region
        $region41: #{lap_loss2.1} parent=39 // pred_check
          %p284 = pneg %p44
        $region42: #{lap_loss2.1} parent=39 // pred_check_branch
          %286 = sbr.rel (%p284) target = $region44
        $region43: #{lap_loss2.1} parent=39 // pred_region
          %287 = dma.done %s280, 256
        $region44: #{lap_loss2.1} parent=39 // pred_fallthru
          _
        %s288 = sand.u32 %s23, 1
        %s289 = scalar_lea.sflag [#allocation5], %s288
        %s290 = sand.u32 %s57, 1
        %s291 = smul.addr %s290, 16
        %s292 = scalar_lea.vmem [#allocation4], %s291
        // Predicated region
        $region45: #{lap_loss2.1} parent=39 // pred_check
          %p293 = pneg %p70
        $region46: #{lap_loss2.1} parent=39 // pred_check_branch
          %295 = sbr.rel (%p293) target = $region48
        $region47: #{lap_loss2.1} parent=39 // pred_region
          %296 = dma.done %s289, 256
        $region48: #{lap_loss2.1} parent=39 // pred_fallthru
          _
        %s297 = sand.u32 %s23, 1
        %s298 = scalar_lea.sflag [#allocation5], %s297
        %s299 = sand.u32 %s83, 1
        %s300 = smul.addr %s299, 16
        %s301 = scalar_lea.vmem [#allocation6], %s300
        // Predicated region
        $region49: #{lap_loss2.1} parent=39 // pred_check
          %p302 = pneg %p96
        $region50: #{lap_loss2.1} parent=39 // pred_check_branch
          %304 = sbr.rel (%p302) target = $region52
        $region51: #{lap_loss2.1} parent=39 // pred_region
          %305 = dma.done %s298, 256
        $region52: #{lap_loss2.1} parent=39 // pred_fallthru
          _
        // Predicated region
        $region53: #{lap_loss2.1} parent=39 // pred_check
          %p306 = pneg %p117
        $region54: #{lap_loss2.1} parent=39 // pred_check_branch
          %308 = sbr.rel (%p306) target = $region56
        $region55: #{lap_loss2.1} parent=39 // pred_region
          %309 = dma.done [#allocation8], 768
        $region56: #{lap_loss2.1} parent=39 // pred_fallthru
          _
        // Predicated region
        $region57: #{lap_loss2.1} parent=39 // pred_check
          %p310 = pneg %p138
        $region58: #{lap_loss2.1} parent=39 // pred_check_branch
          %312 = sbr.rel (%p310) target = $region60
        $region59: #{lap_loss2.1} parent=39 // pred_region
          %313 = dma.done [#allocation8], 768
        $region60: #{lap_loss2.1} parent=39 // pred_fallthru
          _
        %s314 = sand.u32 %s31, 1
        %s315 = scalar_lea.sflag [#allocation3], %s314
        %s316 = sand.u32 %s31, 1
        %s317 = smul.addr %s316, 16
        %s318 = scalar_lea.vmem [#allocation2], %s317
        %p319 = pneg %p44
        %p320 = pneg %p41
        %s321 = sand.u32 %s23, 1
        %s322 = scalar_lea.sflag [#allocation5], %s321
        %s323 = sand.u32 %s57, 1
        %s324 = smul.addr %s323, 16
        %s325 = scalar_lea.vmem [#allocation4], %s324
        %p326 = pneg %p70
        %p327 = pneg %p67
        %s328 = sand.u32 %s23, 1
        %s329 = scalar_lea.sflag [#allocation5], %s328
        %s330 = sand.u32 %s83, 1
        %s331 = smul.addr %s330, 16
        %s332 = scalar_lea.vmem [#allocation6], %s331
        %p333 = pneg %p96
        %p334 = pneg %p93
        %p335 = pneg %p117
        %p336 = pneg %p114
        %p337 = pneg %p138
        %p338 = pneg %p135
        %p339 = pneg %p164
        %p340 = pneg %p161
        %p341 = scmp.lt.s32.totalorder %s23, 1
        %s342 = scalar_select %p341, %s23, 1
        %s343 = smul.addr %s342, 4
        %s344 = scalar_lea.vmem %s5, %s343
        %p345 = scmp.lt.s32.totalorder %s23, 1
        %s346 = scalar_select %p345, %s23, 1
        %s347 = smul.addr %s346, 4
        %s348 = scalar_lea.vmem %s5, %s347
        %v349 = vld [vmem:[#allocation7] sm:$0xff]
        %v350 = vld [vmem:[#allocation7 + $0x8] sm:$0xff]
        %v351 = vld [vmem:[#allocation7 + $0x10] sm:$0xff]
        %v352 = vld [vmem:[#allocation7 + $0x18] sm:$0xff]
        %v353 = vld [vmem:[#allocation7 + $0x20] sm:$0xff]
        %v354 = vld [vmem:[#allocation7 + $0x28] sm:$0xff]
        %v355 = vld [vmem:[%s283] sm:$0xff]
        %v356 = vld [vmem:[%s283 + $0x8] sm:$0xff]
        %v357 = vld [vmem:[%s292] sm:$0xff]
        %v358 = vld [vmem:[%s292 + $0x8] sm:$0xff]
        %v359 = vld [vmem:[%s301] sm:$0xff]
        %v360 = vld [vmem:[%s301 + $0x8] sm:$0xff]
        %vm361 = vcmask 130048
        %v363 = vsel %vm361, %v355, 0
        %v366 = vsel %vm361, %v356, 0
        %368 = vmatprep.subr.mxu0 %v350
        %369 = vmatpush1.msra.mxu0 %v349
        %370 = vmatprep.subr.mxu0 %v353
        %371 = vmatpush1.msra.mxu0 %v352
        %372 = vmatprep.subr.mxu0 0.0
        %373 = vmatpush1.msra.mxu0 0.0
        %374 = vmatprep.subr.mxu0 0.0
        %375 = vmatpush1.msra.mxu0 0.0
        %376 = vmatprep.subr.mxu0 0.0
        %377 = vmatpush1.msra.mxu0 0.0
        %378 = vmatprep.subr.mxu0 0.0
        %379 = vmatpush1.msra.mxu0 0.0
        %380 = vmatprep.subr.mxu0 0.0
        %381 = vmatpush1.msra.mxu0 0.0
        %382 = vmatprep.subr.mxu0 0.0
        %383 = vmatpush1.msra.mxu0 0.0
        %384 = vmatprep.subr.mxu0 0.0
        %385 = vmatpush1.msra.mxu0 0.0
        %386 = vmatprep.subr.mxu0 0.0
        %387 = vmatpush1.msra.mxu0 0.0
        %388 = vmatprep.subr.mxu0 0.0
        %389 = vmatpush1.msra.mxu0 0.0
        %390 = vmatprep.subr.mxu0 0.0
        %391 = vmatpush1.msra.mxu0 0.0
        %392 = vmatprep.subr.mxu0 0.0
        %393 = vmatpush1.msra.mxu0 0.0
        %394 = vmatprep.subr.mxu0 0.0
        %395 = vmatpush1.msra.mxu0 0.0
        %396 = vmatprep.subr.mxu0 0.0
        %397 = vmatpush1.msra.mxu0 0.0
        %398 = vmatprep.subr.mxu0 0.0
        %399 = vmatpush1.msra.mxu0 0.0
        %400 = vmatprep.subr.mxu0 0.0
        %401 = vmatpush1.msra.mxu0 0.0
        %402 = vmatprep.subr.mxu0 0.0
        %403 = vmatpush1.msra.mxu0 0.0
        %404 = vmatprep.subr.mxu0 0.0
        %405 = vmatpush1.msra.mxu0 0.0
        %406 = vmatprep.subr.mxu0 0.0
        %407 = vmatpush1.msra.mxu0 0.0
        %408 = vmatprep.subr.mxu0 0.0
        %409 = vmatpush1.msra.mxu0 0.0
        %410 = vmatprep.subr.mxu0 0.0
        %411 = vmatpush1.msra.mxu0 0.0
        %412 = vmatprep.subr.mxu0 0.0
        %413 = vmatpush1.msra.mxu0 0.0
        %414 = vmatprep.subr.mxu0 0.0
        %415 = vmatpush1.msra.mxu0 0.0
        %416 = vmatprep.subr.mxu0 0.0
        %417 = vmatpush1.msra.mxu0 0.0
        %418 = vmatprep.subr.mxu0 0.0
        %419 = vmatpush1.msra.mxu0 0.0
        %420 = vmatprep.subr.mxu0 0.0
        %421 = vmatpush1.msra.mxu0 0.0
        %422 = vmatprep.subr.mxu0 0.0
        %423 = vmatpush1.msra.mxu0 0.0
        %424 = vmatprep.subr.mxu0 0.0
        %425 = vmatpush1.msra.mxu0 0.0
        %426 = vmatprep.subr.mxu0 0.0
        %427 = vmatpush1.msra.mxu0 0.0
        %428 = vmatprep.subr.mxu0 0.0
        %429 = vmatpush1.msra.mxu0 0.0
        %430 = vmatprep.subr.mxu0 0.0
        %431 = vmatpush1.msra.mxu0 0.0
        %432 = vmatprep.mubr.f32.mxu0 0.0
        %433 = vmatmul.mubr.f32.gmra.mrb[0].mxu0 %v363
        %v434 = vpop.f32.mrb[0].mxu0
        %v435 = vadd.f32 0.0, %v434
        %v436 = vpop.f32.mrb[0].mxu0
        %v437 = vadd.f32 0.0, %v436
        %438 = vmatprep.mubr.f32.mxu0 0.0
        %439 = vmatmul.mubr.f32.gmra.mrb[0].mxu0 %v366
        %v440 = vpop.f32.mrb[0].mxu0
        %v441 = vadd.f32 0.0, %v440
        %v442 = vpop.f32.mrb[0].mxu0
        %v443 = vadd.f32 0.0, %v442
        %444 = vdwg.mxu0
        %445 = vmatprep.subr.mxu0 0.0
        %446 = vmatpush1.msra.mxu0 %v351
        %447 = vmatprep.subr.mxu0 0.0
        %448 = vmatpush1.msra.mxu0 %v354
        %449 = vmatprep.subr.mxu0 0.0
        %450 = vmatpush1.msra.mxu0 0.0
        %451 = vmatprep.subr.mxu0 0.0
        %452 = vmatpush1.msra.mxu0 0.0
        %453 = vmatprep.subr.mxu0 0.0
        %454 = vmatpush1.msra.mxu0 0.0
        %455 = vmatprep.subr.mxu0 0.0
        %456 = vmatpush1.msra.mxu0 0.0
        %457 = vmatprep.subr.mxu0 0.0
        %458 = vmatpush1.msra.mxu0 0.0
        %459 = vmatprep.subr.mxu0 0.0
        %460 = vmatpush1.msra.mxu0 0.0
        %461 = vmatprep.subr.mxu0 0.0
        %462 = vmatpush1.msra.mxu0 0.0
        %463 = vmatprep.subr.mxu0 0.0
        %464 = vmatpush1.msra.mxu0 0.0
        %465 = vmatprep.subr.mxu0 0.0
        %466 = vmatpush1.msra.mxu0 0.0
        %467 = vmatprep.subr.mxu0 0.0
        %468 = vmatpush1.msra.mxu0 0.0
        %469 = vmatprep.subr.mxu0 0.0
        %470 = vmatpush1.msra.mxu0 0.0
        %471 = vmatprep.subr.mxu0 0.0
        %472 = vmatpush1.msra.mxu0 0.0
        %473 = vmatprep.subr.mxu0 0.0
        %474 = vmatpush1.msra.mxu0 0.0
        %475 = vmatprep.subr.mxu0 0.0
        %476 = vmatpush1.msra.mxu0 0.0
        %477 = vmatprep.subr.mxu0 0.0
        %478 = vmatpush1.msra.mxu0 0.0
        %479 = vmatprep.subr.mxu0 0.0
        %480 = vmatpush1.msra.mxu0 0.0
        %481 = vmatprep.subr.mxu0 0.0
        %482 = vmatpush1.msra.mxu0 0.0
        %483 = vmatprep.subr.mxu0 0.0
        %484 = vmatpush1.msra.mxu0 0.0
        %485 = vmatprep.subr.mxu0 0.0
        %486 = vmatpush1.msra.mxu0 0.0
        %487 = vmatprep.subr.mxu0 0.0
        %488 = vmatpush1.msra.mxu0 0.0
        %489 = vmatprep.subr.mxu0 0.0
        %490 = vmatpush1.msra.mxu0 0.0
        %491 = vmatprep.subr.mxu0 0.0
        %492 = vmatpush1.msra.mxu0 0.0
        %493 = vmatprep.subr.mxu0 0.0
        %494 = vmatpush1.msra.mxu0 0.0
        %495 = vmatprep.subr.mxu0 0.0
        %496 = vmatpush1.msra.mxu0 0.0
        %497 = vmatprep.subr.mxu0 0.0
        %498 = vmatpush1.msra.mxu0 0.0
        %499 = vmatprep.subr.mxu0 0.0
        %500 = vmatpush1.msra.mxu0 0.0
        %501 = vmatprep.subr.mxu0 0.0
        %502 = vmatpush1.msra.mxu0 0.0
        %503 = vmatprep.subr.mxu0 0.0
        %504 = vmatpush1.msra.mxu0 0.0
        %505 = vmatprep.subr.mxu0 0.0
        %506 = vmatpush1.msra.mxu0 0.0
        %507 = vmatprep.subr.mxu0 0.0
        %508 = vmatpush1.msra.mxu0 0.0
        %509 = vmatprep.mubr.f32.mxu0 0.0
        %510 = vmatmul.mubr.f32.gmra.mrb[0].mxu0 %v363
        %v511 = vpop.f32.mrb[0].mxu0
        %v512 = vadd.f32 0.0, %v511
        %v513 = vpop.f32.mrb[0].mxu0
        %514 = vmatprep.mubr.f32.mxu0 0.0
        %515 = vmatmul.mubr.f32.gmra.mrb[0].mxu0 %v366
        %v516 = vpop.f32.mrb[0].mxu0
        %v517 = vadd.f32 0.0, %v516
        %v518 = vpop.f32.mrb[0].mxu0
        %519 = vdwg.mxu0
        %v521 = vsel %vm361, %v357, 0
        %v524 = vsel %vm361, %v358, 0
        %526 = vmatprep.subr.mxu0 %v350
        %527 = vmatpush1.msra.mxu0 %v349
        %528 = vmatprep.subr.mxu0 %v353
        %529 = vmatpush1.msra.mxu0 %v352
        %530 = vmatprep.subr.mxu0 0.0
        %531 = vmatpush1.msra.mxu0 0.0
        %532 = vmatprep.subr.mxu0 0.0
        %533 = vmatpush1.msra.mxu0 0.0
        %534 = vmatprep.subr.mxu0 0.0
        %535 = vmatpush1.msra.mxu0 0.0
        %536 = vmatprep.subr.mxu0 0.0
        %537 = vmatpush1.msra.mxu0 0.0
        %538 = vmatprep.subr.mxu0 0.0
        %539 = vmatpush1.msra.mxu0 0.0
        %540 = vmatprep.subr.mxu0 0.0
        %541 = vmatpush1.msra.mxu0 0.0
        %542 = vmatprep.subr.mxu0 0.0
        %543 = vmatpush1.msra.mxu0 0.0
        %544 = vmatprep.subr.mxu0 0.0
        %545 = vmatpush1.msra.mxu0 0.0
        %546 = vmatprep.subr.mxu0 0.0
        %547 = vmatpush1.msra.mxu0 0.0
        %548 = vmatprep.subr.mxu0 0.0
        %549 = vmatpush1.msra.mxu0 0.0
        %550 = vmatprep.subr.mxu0 0.0
        %551 = vmatpush1.msra.mxu0 0.0
        %552 = vmatprep.subr.mxu0 0.0
        %553 = vmatpush1.msra.mxu0 0.0
        %554 = vmatprep.subr.mxu0 0.0
        %555 = vmatpush1.msra.mxu0 0.0
        %556 = vmatprep.subr.mxu0 0.0
        %557 = vmatpush1.msra.mxu0 0.0
        %558 = vmatprep.subr.mxu0 0.0
        %559 = vmatpush1.msra.mxu0 0.0
        %560 = vmatprep.subr.mxu0 0.0
        %561 = vmatpush1.msra.mxu0 0.0
        %562 = vmatprep.subr.mxu0 0.0
        %563 = vmatpush1.msra.mxu0 0.0
        %564 = vmatprep.subr.mxu0 0.0
        %565 = vmatpush1.msra.mxu0 0.0
        %566 = vmatprep.subr.mxu0 0.0
        %567 = vmatpush1.msra.mxu0 0.0
        %568 = vmatprep.subr.mxu0 0.0
        %569 = vmatpush1.msra.mxu0 0.0
        %570 = vmatprep.subr.mxu0 0.0
        %571 = vmatpush1.msra.mxu0 0.0
        %572 = vmatprep.subr.mxu0 0.0
        %573 = vmatpush1.msra.mxu0 0.0
        %574 = vmatprep.subr.mxu0 0.0
        %575 = vmatpush1.msra.mxu0 0.0
        %576 = vmatprep.subr.mxu0 0.0
        %577 = vmatpush1.msra.mxu0 0.0
        %578 = vmatprep.subr.mxu0 0.0
        %579 = vmatpush1.msra.mxu0 0.0
        %580 = vmatprep.subr.mxu0 0.0
        %581 = vmatpush1.msra.mxu0 0.0
        %582 = vmatprep.subr.mxu0 0.0
        %583 = vmatpush1.msra.mxu0 0.0
        %584 = vmatprep.subr.mxu0 0.0
        %585 = vmatpush1.msra.mxu0 0.0
        %586 = vmatprep.subr.mxu0 0.0
        %587 = vmatpush1.msra.mxu0 0.0
        %588 = vmatprep.subr.mxu0 0.0
        %589 = vmatpush1.msra.mxu0 0.0
        %590 = vmatprep.mubr.f32.mxu0 0.0
        %591 = vmatmul.mubr.f32.gmra.mrb[0].mxu0 %v521
        %v592 = vpop.f32.mrb[0].mxu0
        %v593 = vadd.f32 0.0, %v592
        %v594 = vpop.f32.mrb[0].mxu0
        %v595 = vadd.f32 0.0, %v594
        %596 = vmatprep.mubr.f32.mxu0 0.0
        %597 = vmatmul.mubr.f32.gmra.mrb[0].mxu0 %v524
        %v598 = vpop.f32.mrb[0].mxu0
        %v599 = vadd.f32 0.0, %v598
        %v600 = vpop.f32.mrb[0].mxu0
        %v601 = vadd.f32 0.0, %v600
        %602 = vdwg.mxu0
        %603 = vmatprep.subr.mxu0 0.0
        %604 = vmatpush1.msra.mxu0 %v351
        %605 = vmatprep.subr.mxu0 0.0
        %606 = vmatpush1.msra.mxu0 %v354
        %607 = vmatprep.subr.mxu0 0.0
        %608 = vmatpush1.msra.mxu0 0.0
        %609 = vmatprep.subr.mxu0 0.0
        %610 = vmatpush1.msra.mxu0 0.0
        %611 = vmatprep.subr.mxu0 0.0
        %612 = vmatpush1.msra.mxu0 0.0
        %613 = vmatprep.subr.mxu0 0.0
        %614 = vmatpush1.msra.mxu0 0.0
        %615 = vmatprep.subr.mxu0 0.0
        %616 = vmatpush1.msra.mxu0 0.0
        %617 = vmatprep.subr.mxu0 0.0
        %618 = vmatpush1.msra.mxu0 0.0
        %619 = vmatprep.subr.mxu0 0.0
        %620 = vmatpush1.msra.mxu0 0.0
        %621 = vmatprep.subr.mxu0 0.0
        %622 = vmatpush1.msra.mxu0 0.0
        %623 = vmatprep.subr.mxu0 0.0
        %624 = vmatpush1.msra.mxu0 0.0
        %625 = vmatprep.subr.mxu0 0.0
        %626 = vmatpush1.msra.mxu0 0.0
        %627 = vmatprep.subr.mxu0 0.0
        %628 = vmatpush1.msra.mxu0 0.0
        %629 = vmatprep.subr.mxu0 0.0
        %630 = vmatpush1.msra.mxu0 0.0
        %631 = vmatprep.subr.mxu0 0.0
        %632 = vmatpush1.msra.mxu0 0.0
        %633 = vmatprep.subr.mxu0 0.0
        %634 = vmatpush1.msra.mxu0 0.0
        %635 = vmatprep.subr.mxu0 0.0
        %636 = vmatpush1.msra.mxu0 0.0
        %637 = vmatprep.subr.mxu0 0.0
        %638 = vmatpush1.msra.mxu0 0.0
        %639 = vmatprep.subr.mxu0 0.0
        %640 = vmatpush1.msra.mxu0 0.0
        %641 = vmatprep.subr.mxu0 0.0
        %642 = vmatpush1.msra.mxu0 0.0
        %643 = vmatprep.subr.mxu0 0.0
        %644 = vmatpush1.msra.mxu0 0.0
        %645 = vmatprep.subr.mxu0 0.0
        %646 = vmatpush1.msra.mxu0 0.0
        %647 = vmatprep.subr.mxu0 0.0
        %648 = vmatpush1.msra.mxu0 0.0
        %649 = vmatprep.subr.mxu0 0.0
        %650 = vmatpush1.msra.mxu0 0.0
        %651 = vmatprep.subr.mxu0 0.0
        %652 = vmatpush1.msra.mxu0 0.0
        %653 = vmatprep.subr.mxu0 0.0
        %654 = vmatpush1.msra.mxu0 0.0
        %655 = vmatprep.subr.mxu0 0.0
        %656 = vmatpush1.msra.mxu0 0.0
        %657 = vmatprep.subr.mxu0 0.0
        %658 = vmatpush1.msra.mxu0 0.0
        %659 = vmatprep.subr.mxu0 0.0
        %660 = vmatpush1.msra.mxu0 0.0
        %661 = vmatprep.subr.mxu0 0.0
        %662 = vmatpush1.msra.mxu0 0.0
        %663 = vmatprep.subr.mxu0 0.0
        %664 = vmatpush1.msra.mxu0 0.0
        %665 = vmatprep.subr.mxu0 0.0
        %666 = vmatpush1.msra.mxu0 0.0
        %667 = vmatprep.mubr.f32.mxu0 0.0
        %668 = vmatmul.mubr.f32.gmra.mrb[0].mxu0 %v521
        %v669 = vpop.f32.mrb[0].mxu0
        %v670 = vadd.f32 0.0, %v669
        %v671 = vpop.f32.mrb[0].mxu0
        %672 = vmatprep.mubr.f32.mxu0 0.0
        %673 = vmatmul.mubr.f32.gmra.mrb[0].mxu0 %v524
        %v674 = vpop.f32.mrb[0].mxu0
        %v675 = vadd.f32 0.0, %v674
        %v676 = vpop.f32.mrb[0].mxu0
        %677 = vdwg.mxu0
        %v679 = vsel %vm361, %v359, 0
        %v682 = vsel %vm361, %v360, 0
        %684 = vmatprep.subr.mxu0 %v350
        %685 = vmatpush1.msra.mxu0 %v349
        %686 = vmatprep.subr.mxu0 %v353
        %687 = vmatpush1.msra.mxu0 %v352
        %688 = vmatprep.subr.mxu0 0.0
        %689 = vmatpush1.msra.mxu0 0.0
        %690 = vmatprep.subr.mxu0 0.0
        %691 = vmatpush1.msra.mxu0 0.0
        %692 = vmatprep.subr.mxu0 0.0
        %693 = vmatpush1.msra.mxu0 0.0
        %694 = vmatprep.subr.mxu0 0.0
        %695 = vmatpush1.msra.mxu0 0.0
        %696 = vmatprep.subr.mxu0 0.0
        %697 = vmatpush1.msra.mxu0 0.0
        %698 = vmatprep.subr.mxu0 0.0
        %699 = vmatpush1.msra.mxu0 0.0
        %700 = vmatprep.subr.mxu0 0.0
        %701 = vmatpush1.msra.mxu0 0.0
        %702 = vmatprep.subr.mxu0 0.0
        %703 = vmatpush1.msra.mxu0 0.0
        %704 = vmatprep.subr.mxu0 0.0
        %705 = vmatpush1.msra.mxu0 0.0
        %706 = vmatprep.subr.mxu0 0.0
        %707 = vmatpush1.msra.mxu0 0.0
        %708 = vmatprep.subr.mxu0 0.0
        %709 = vmatpush1.msra.mxu0 0.0
        %710 = vmatprep.subr.mxu0 0.0
        %711 = vmatpush1.msra.mxu0 0.0
        %712 = vmatprep.subr.mxu0 0.0
        %713 = vmatpush1.msra.mxu0 0.0
        %714 = vmatprep.subr.mxu0 0.0
        %715 = vmatpush1.msra.mxu0 0.0
        %716 = vmatprep.subr.mxu0 0.0
        %717 = vmatpush1.msra.mxu0 0.0
        %718 = vmatprep.subr.mxu0 0.0
        %719 = vmatpush1.msra.mxu0 0.0
        %720 = vmatprep.subr.mxu0 0.0
        %721 = vmatpush1.msra.mxu0 0.0
        %722 = vmatprep.subr.mxu0 0.0
        %723 = vmatpush1.msra.mxu0 0.0
        %724 = vmatprep.subr.mxu0 0.0
        %725 = vmatpush1.msra.mxu0 0.0
        %726 = vmatprep.subr.mxu0 0.0
        %727 = vmatpush1.msra.mxu0 0.0
        %728 = vmatprep.subr.mxu0 0.0
        %729 = vmatpush1.msra.mxu0 0.0
        %730 = vmatprep.subr.mxu0 0.0
        %731 = vmatpush1.msra.mxu0 0.0
        %732 = vmatprep.subr.mxu0 0.0
        %733 = vmatpush1.msra.mxu0 0.0
        %734 = vmatprep.subr.mxu0 0.0
        %735 = vmatpush1.msra.mxu0 0.0
        %736 = vmatprep.subr.mxu0 0.0
        %737 = vmatpush1.msra.mxu0 0.0
        %738 = vmatprep.subr.mxu0 0.0
        %739 = vmatpush1.msra.mxu0 0.0
        %740 = vmatprep.subr.mxu0 0.0
        %741 = vmatpush1.msra.mxu0 0.0
        %742 = vmatprep.subr.mxu0 0.0
        %743 = vmatpush1.msra.mxu0 0.0
        %744 = vmatprep.subr.mxu0 0.0
        %745 = vmatpush1.msra.mxu0 0.0
        %746 = vmatprep.subr.mxu0 0.0
        %747 = vmatpush1.msra.mxu0 0.0
        %748 = vmatprep.mubr.f32.mxu0 0.0
        %749 = vmatmul.mubr.f32.gmra.mrb[0].mxu0 %v679
        %v750 = vpop.f32.mrb[0].mxu0
        %v751 = vadd.f32 0.0, %v750
        %v752 = vpop.f32.mrb[0].mxu0
        %v753 = vadd.f32 0.0, %v752
        %754 = vmatprep.mubr.f32.mxu0 0.0
        %755 = vmatmul.mubr.f32.gmra.mrb[0].mxu0 %v682
        %v756 = vpop.f32.mrb[0].mxu0
        %v757 = vadd.f32 0.0, %v756
        %v758 = vpop.f32.mrb[0].mxu0
        %v759 = vadd.f32 0.0, %v758
        %760 = vdwg.mxu0
        %761 = vmatprep.subr.mxu0 0.0
        %762 = vmatpush1.msra.mxu0 %v351
        %763 = vmatprep.subr.mxu0 0.0
        %764 = vmatpush1.msra.mxu0 %v354
        %765 = vmatprep.subr.mxu0 0.0
        %766 = vmatpush1.msra.mxu0 0.0
        %767 = vmatprep.subr.mxu0 0.0
        %768 = vmatpush1.msra.mxu0 0.0
        %769 = vmatprep.subr.mxu0 0.0
        %770 = vmatpush1.msra.mxu0 0.0
        %771 = vmatprep.subr.mxu0 0.0
        %772 = vmatpush1.msra.mxu0 0.0
        %773 = vmatprep.subr.mxu0 0.0
        %774 = vmatpush1.msra.mxu0 0.0
        %775 = vmatprep.subr.mxu0 0.0
        %776 = vmatpush1.msra.mxu0 0.0
        %777 = vmatprep.subr.mxu0 0.0
        %778 = vmatpush1.msra.mxu0 0.0
        %779 = vmatprep.subr.mxu0 0.0
        %780 = vmatpush1.msra.mxu0 0.0
        %781 = vmatprep.subr.mxu0 0.0
        %782 = vmatpush1.msra.mxu0 0.0
        %783 = vmatprep.subr.mxu0 0.0
        %784 = vmatpush1.msra.mxu0 0.0
        %785 = vmatprep.subr.mxu0 0.0
        %786 = vmatpush1.msra.mxu0 0.0
        %787 = vmatprep.subr.mxu0 0.0
        %788 = vmatpush1.msra.mxu0 0.0
        %789 = vmatprep.subr.mxu0 0.0
        %790 = vmatpush1.msra.mxu0 0.0
        %791 = vmatprep.subr.mxu0 0.0
        %792 = vmatpush1.msra.mxu0 0.0
        %793 = vmatprep.subr.mxu0 0.0
        %794 = vmatpush1.msra.mxu0 0.0
        %795 = vmatprep.subr.mxu0 0.0
        %796 = vmatpush1.msra.mxu0 0.0
        %797 = vmatprep.subr.mxu0 0.0
        %798 = vmatpush1.msra.mxu0 0.0
        %799 = vmatprep.subr.mxu0 0.0
        %800 = vmatpush1.msra.mxu0 0.0
        %801 = vmatprep.subr.mxu0 0.0
        %802 = vmatpush1.msra.mxu0 0.0
        %803 = vmatprep.subr.mxu0 0.0
        %804 = vmatpush1.msra.mxu0 0.0
        %805 = vmatprep.subr.mxu0 0.0
        %806 = vmatpush1.msra.mxu0 0.0
        %807 = vmatprep.subr.mxu0 0.0
        %808 = vmatpush1.msra.mxu0 0.0
        %809 = vmatprep.subr.mxu0 0.0
        %810 = vmatpush1.msra.mxu0 0.0
        %811 = vmatprep.subr.mxu0 0.0
        %812 = vmatpush1.msra.mxu0 0.0
        %813 = vmatprep.subr.mxu0 0.0
        %814 = vmatpush1.msra.mxu0 0.0
        %815 = vmatprep.subr.mxu0 0.0
        %816 = vmatpush1.msra.mxu0 0.0
        %817 = vmatprep.subr.mxu0 0.0
        %818 = vmatpush1.msra.mxu0 0.0
        %819 = vmatprep.subr.mxu0 0.0
        %820 = vmatpush1.msra.mxu0 0.0
        %821 = vmatprep.subr.mxu0 0.0
        %822 = vmatpush1.msra.mxu0 0.0
        %823 = vmatprep.subr.mxu0 0.0
        %824 = vmatpush1.msra.mxu0 0.0
        %825 = vmatprep.mubr.f32.mxu0 0.0
        %826 = vmatmul.mubr.f32.gmra.mrb[0].mxu0 %v679
        %v827 = vpop.f32.mrb[0].mxu0
        %v828 = vadd.f32 0.0, %v827
        %v829 = vpop.f32.mrb[0].mxu0
        %830 = vmatprep.mubr.f32.mxu0 0.0
        %831 = vmatmul.mubr.f32.gmra.mrb[0].mxu0 %v682
        %v832 = vpop.f32.mrb[0].mxu0
        %v833 = vadd.f32 0.0, %v832
        %v834 = vpop.f32.mrb[0].mxu0
        %835 = vdwg.mxu0
        %v836 = vld [vmem:[#allocation9] sm:$0xff]
        %v837 = vld [vmem:[#allocation9 + $0x8] sm:$0xff]
        %v839 = vsel %vm361, %v836, 0
        %v842 = vsel %vm361, %v837, 0
        %844 = vmatprep.subr.mxu0 0.0
        %845 = vmatpush1.msra.mxu0 %v435
        %846 = vmatprep.subr.mxu0 0.0
        %847 = vmatpush1.msra.mxu0 %v441
        %848 = vmatprep.subr.mxu0 0.0
        %849 = vmatpush1.msra.mxu0 0.0
        %850 = vmatprep.subr.mxu0 0.0
        %851 = vmatpush1.msra.mxu0 0.0
        %852 = vmatprep.subr.mxu0 0.0
        %853 = vmatpush1.msra.mxu0 0.0
        %854 = vmatprep.subr.mxu0 0.0
        %855 = vmatpush1.msra.mxu0 0.0
        %856 = vmatprep.subr.mxu0 0.0
        %857 = vmatpush1.msra.mxu0 0.0
        %858 = vmatprep.subr.mxu0 0.0
        %859 = vmatpush1.msra.mxu0 0.0
        %860 = vmatprep.subr.mxu0 0.0
        %861 = vmatpush1.msra.mxu0 0.0
        %862 = vmatprep.subr.mxu0 0.0
        %863 = vmatpush1.msra.mxu0 0.0
        %864 = vmatprep.subr.mxu0 0.0
        %865 = vmatpush1.msra.mxu0 0.0
        %866 = vmatprep.subr.mxu0 0.0
        %867 = vmatpush1.msra.mxu0 0.0
        %868 = vmatprep.subr.mxu0 0.0
        %869 = vmatpush1.msra.mxu0 0.0
        %870 = vmatprep.subr.mxu0 0.0
        %871 = vmatpush1.msra.mxu0 0.0
        %872 = vmatprep.subr.mxu0 0.0
        %873 = vmatpush1.msra.mxu0 0.0
        %874 = vmatprep.subr.mxu0 0.0
        %875 = vmatpush1.msra.mxu0 0.0
        %876 = vmatprep.subr.mxu0 0.0
        %877 = vmatpush1.msra.mxu0 0.0
        %878 = vmatprep.subr.mxu0 0.0
        %879 = vmatpush1.msra.mxu0 0.0
        %880 = vmatprep.subr.mxu0 0.0
        %881 = vmatpush1.msra.mxu0 0.0
        %882 = vmatprep.subr.mxu0 0.0
        %883 = vmatpush1.msra.mxu0 0.0
        %884 = vmatprep.subr.mxu0 0.0
        %885 = vmatpush1.msra.mxu0 0.0
        %886 = vmatprep.subr.mxu0 0.0
        %887 = vmatpush1.msra.mxu0 0.0
        %888 = vmatprep.subr.mxu0 0.0
        %889 = vmatpush1.msra.mxu0 0.0
        %890 = vmatprep.subr.mxu0 0.0
        %891 = vmatpush1.msra.mxu0 0.0
        %892 = vmatprep.subr.mxu0 0.0
        %893 = vmatpush1.msra.mxu0 0.0
        %894 = vmatprep.subr.mxu0 0.0
        %895 = vmatpush1.msra.mxu0 0.0
        %896 = vmatprep.subr.mxu0 0.0
        %897 = vmatpush1.msra.mxu0 0.0
        %898 = vmatprep.subr.mxu0 0.0
        %899 = vmatpush1.msra.mxu0 0.0
        %900 = vmatprep.subr.mxu0 0.0
        %901 = vmatpush1.msra.mxu0 0.0
        %902 = vmatprep.subr.mxu0 0.0
        %903 = vmatpush1.msra.mxu0 0.0
        %904 = vmatprep.subr.mxu0 0.0
        %905 = vmatpush1.msra.mxu0 0.0
        %906 = vmatprep.subr.mxu0 0.0
        %907 = vmatpush1.msra.mxu0 0.0
        %908 = vmatprep.mubr.f32.mxu0 0.0
        %909 = vmatmul.mubr.f32.gmra.mrb[0].mxu0 %v839
        %v910 = vpop.f32.mrb[0].mxu0
        %v911 = vadd.f32 0.0, %v910
        %v912 = vpop.f32.mrb[0].mxu0
        %913 = vmatprep.mubr.f32.mxu0 0.0
        %914 = vmatmul.mubr.f32.gmra.mrb[0].mxu0 %v842
        %v915 = vpop.f32.mrb[0].mxu0
        %v916 = vadd.f32 0.0, %v915
        %v917 = vpop.f32.mrb[0].mxu0
        %918 = vdwg.mxu0
        %v919 = vsub.f32 %v355, %v911
        %v920 = vsub.f32 %v356, %v916
        %921 = vmatprep.subr.mxu0 0.0
        %922 = vmatpush1.msra.mxu0 %v593
        %923 = vmatprep.subr.mxu0 0.0
        %924 = vmatpush1.msra.mxu0 %v599
        %925 = vmatprep.subr.mxu0 0.0
        %926 = vmatpush1.msra.mxu0 0.0
        %927 = vmatprep.subr.mxu0 0.0
        %928 = vmatpush1.msra.mxu0 0.0
        %929 = vmatprep.subr.mxu0 0.0
        %930 = vmatpush1.msra.mxu0 0.0
        %931 = vmatprep.subr.mxu0 0.0
        %932 = vmatpush1.msra.mxu0 0.0
        %933 = vmatprep.subr.mxu0 0.0
        %934 = vmatpush1.msra.mxu0 0.0
        %935 = vmatprep.subr.mxu0 0.0
        %936 = vmatpush1.msra.mxu0 0.0
        %937 = vmatprep.subr.mxu0 0.0
        %938 = vmatpush1.msra.mxu0 0.0
        %939 = vmatprep.subr.mxu0 0.0
        %940 = vmatpush1.msra.mxu0 0.0
        %941 = vmatprep.subr.mxu0 0.0
        %942 = vmatpush1.msra.mxu0 0.0
        %943 = vmatprep.subr.mxu0 0.0
        %944 = vmatpush1.msra.mxu0 0.0
        %945 = vmatprep.subr.mxu0 0.0
        %946 = vmatpush1.msra.mxu0 0.0
        %947 = vmatprep.subr.mxu0 0.0
        %948 = vmatpush1.msra.mxu0 0.0
        %949 = vmatprep.subr.mxu0 0.0
        %950 = vmatpush1.msra.mxu0 0.0
        %951 = vmatprep.subr.mxu0 0.0
        %952 = vmatpush1.msra.mxu0 0.0
        %953 = vmatprep.subr.mxu0 0.0
        %954 = vmatpush1.msra.mxu0 0.0
        %955 = vmatprep.subr.mxu0 0.0
        %956 = vmatpush1.msra.mxu0 0.0
        %957 = vmatprep.subr.mxu0 0.0
        %958 = vmatpush1.msra.mxu0 0.0
        %959 = vmatprep.subr.mxu0 0.0
        %960 = vmatpush1.msra.mxu0 0.0
        %961 = vmatprep.subr.mxu0 0.0
        %962 = vmatpush1.msra.mxu0 0.0
        %963 = vmatprep.subr.mxu0 0.0
        %964 = vmatpush1.msra.mxu0 0.0
        %965 = vmatprep.subr.mxu0 0.0
        %966 = vmatpush1.msra.mxu0 0.0
        %967 = vmatprep.subr.mxu0 0.0
        %968 = vmatpush1.msra.mxu0 0.0
        %969 = vmatprep.subr.mxu0 0.0
        %970 = vmatpush1.msra.mxu0 0.0
        %971 = vmatprep.subr.mxu0 0.0
        %972 = vmatpush1.msra.mxu0 0.0
        %973 = vmatprep.subr.mxu0 0.0
        %974 = vmatpush1.msra.mxu0 0.0
        %975 = vmatprep.subr.mxu0 0.0
        %976 = vmatpush1.msra.mxu0 0.0
        %977 = vmatprep.subr.mxu0 0.0
        %978 = vmatpush1.msra.mxu0 0.0
        %979 = vmatprep.subr.mxu0 0.0
        %980 = vmatpush1.msra.mxu0 0.0
        %981 = vmatprep.subr.mxu0 0.0
        %982 = vmatpush1.msra.mxu0 0.0
        %983 = vmatprep.subr.mxu0 0.0
        %984 = vmatpush1.msra.mxu0 0.0
        %985 = vmatprep.mubr.f32.mxu0 0.0
        %986 = vmatmul.mubr.f32.gmra.mrb[0].mxu0 %v839
        %v987 = vpop.f32.mrb[0].mxu0
        %v988 = vadd.f32 0.0, %v987
        %v989 = vpop.f32.mrb[0].mxu0
        %990 = vmatprep.mubr.f32.mxu0 0.0
        %991 = vmatmul.mubr.f32.gmra.mrb[0].mxu0 %v842
        %v992 = vpop.f32.mrb[0].mxu0
        %v993 = vadd.f32 0.0, %v992
        %v994 = vpop.f32.mrb[0].mxu0
        %995 = vdwg.mxu0
        %v996 = vsub.f32 %v357, %v988
        %v997 = vsub.f32 %v358, %v993
        %998 = vmatprep.subr.mxu0 0.0
        %999 = vmatpush1.msra.mxu0 %v751
        %1000 = vmatprep.subr.mxu0 0.0
        %1001 = vmatpush1.msra.mxu0 %v757
        %1002 = vmatprep.subr.mxu0 0.0
        %1003 = vmatpush1.msra.mxu0 0.0
        %1004 = vmatprep.subr.mxu0 0.0
        %1005 = vmatpush1.msra.mxu0 0.0
        %1006 = vmatprep.subr.mxu0 0.0
        %1007 = vmatpush1.msra.mxu0 0.0
        %1008 = vmatprep.subr.mxu0 0.0
        %1009 = vmatpush1.msra.mxu0 0.0
        %1010 = vmatprep.subr.mxu0 0.0
        %1011 = vmatpush1.msra.mxu0 0.0
        %1012 = vmatprep.subr.mxu0 0.0
        %1013 = vmatpush1.msra.mxu0 0.0
        %1014 = vmatprep.subr.mxu0 0.0
        %1015 = vmatpush1.msra.mxu0 0.0
        %1016 = vmatprep.subr.mxu0 0.0
        %1017 = vmatpush1.msra.mxu0 0.0
        %1018 = vmatprep.subr.mxu0 0.0
        %1019 = vmatpush1.msra.mxu0 0.0
        %1020 = vmatprep.subr.mxu0 0.0
        %1021 = vmatpush1.msra.mxu0 0.0
        %1022 = vmatprep.subr.mxu0 0.0
        %1023 = vmatpush1.msra.mxu0 0.0
        %1024 = vmatprep.subr.mxu0 0.0
        %1025 = vmatpush1.msra.mxu0 0.0
        %1026 = vmatprep.subr.mxu0 0.0
        %1027 = vmatpush1.msra.mxu0 0.0
        %1028 = vmatprep.subr.mxu0 0.0
        %1029 = vmatpush1.msra.mxu0 0.0
        %1030 = vmatprep.subr.mxu0 0.0
        %1031 = vmatpush1.msra.mxu0 0.0
        %1032 = vmatprep.subr.mxu0 0.0
        %1033 = vmatpush1.msra.mxu0 0.0
        %1034 = vmatprep.subr.mxu0 0.0
        %1035 = vmatpush1.msra.mxu0 0.0
        %1036 = vmatprep.subr.mxu0 0.0
        %1037 = vmatpush1.msra.mxu0 0.0
        %1038 = vmatprep.subr.mxu0 0.0
        %1039 = vmatpush1.msra.mxu0 0.0
        %1040 = vmatprep.subr.mxu0 0.0
        %1041 = vmatpush1.msra.mxu0 0.0
        %1042 = vmatprep.subr.mxu0 0.0
        %1043 = vmatpush1.msra.mxu0 0.0
        %1044 = vmatprep.subr.mxu0 0.0
        %1045 = vmatpush1.msra.mxu0 0.0
        %1046 = vmatprep.subr.mxu0 0.0
        %1047 = vmatpush1.msra.mxu0 0.0
        %1048 = vmatprep.subr.mxu0 0.0
        %1049 = vmatpush1.msra.mxu0 0.0
        %1050 = vmatprep.subr.mxu0 0.0
        %1051 = vmatpush1.msra.mxu0 0.0
        %1052 = vmatprep.subr.mxu0 0.0
        %1053 = vmatpush1.msra.mxu0 0.0
        %1054 = vmatprep.subr.mxu0 0.0
        %1055 = vmatpush1.msra.mxu0 0.0
        %1056 = vmatprep.subr.mxu0 0.0
        %1057 = vmatpush1.msra.mxu0 0.0
        %1058 = vmatprep.subr.mxu0 0.0
        %1059 = vmatpush1.msra.mxu0 0.0
        %1060 = vmatprep.subr.mxu0 0.0
        %1061 = vmatpush1.msra.mxu0 0.0
        %1062 = vmatprep.mubr.f32.mxu0 0.0
        %1063 = vmatmul.mubr.f32.gmra.mrb[0].mxu0 %v839
        %v1064 = vpop.f32.mrb[0].mxu0
        %v1065 = vadd.f32 0.0, %v1064
        %v1066 = vpop.f32.mrb[0].mxu0
        %1067 = vmatprep.mubr.f32.mxu0 0.0
        %1068 = vmatmul.mubr.f32.gmra.mrb[0].mxu0 %v842
        %v1069 = vpop.f32.mrb[0].mxu0
        %v1070 = vadd.f32 0.0, %v1069
        %v1071 = vpop.f32.mrb[0].mxu0
        %1072 = vdwg.mxu0
        %v1073 = vsub.f32 %v359, %v1065
        %v1074 = vsub.f32 %v360, %v1070
        %v1075 = vmax.f32 %v996, %v1073
        %v1076 = vmax.f32 %v997, %v1074
        %v1077 = vsub.f32 %v919, %v1075
        %v1078 = vsub.f32 %v920, %v1076
        %v1079 = vand.u32 2147483647, %v1077
        %v1080 = vand.u32 2147483647, %v1078
        %v1081 = vsel %vm361, %v1079, 0.0
        %v1082 = vsel %vm361, %v1080, 0.0
        %v1083 = vadd.f32 %v1081, %v1082
        %v1084 = vrot.slane %v1083, 4
        %v1085 = vadd.f32 %v1083, %v1084
        %v1086 = vrot.slane %v1085, 2
        %v1087 = vadd.f32 %v1085, %v1086
        %v1088 = vrot.slane %v1087, 1
        %v1089 = vadd.f32 %v1087, %v1088
        %s1090 = scalar_lea.vmem [#allocation9], 16
        %v1091 = vld [vmem:[%s1090] sm:$0xff]
        %v1092 = vld [vmem:[%s1090 + $0x8] sm:$0xff]
        %v1094 = vsel %vm361, %v1091, 0
        %v1097 = vsel %vm361, %v1092, 0
        %1099 = vmatprep.subr.mxu0 0.0
        %1100 = vmatpush1.msra.mxu0 %v437
        %1101 = vmatprep.subr.mxu0 0.0
        %1102 = vmatpush1.msra.mxu0 %v443
        %1103 = vmatprep.subr.mxu0 0.0
        %1104 = vmatpush1.msra.mxu0 0.0
        %1105 = vmatprep.subr.mxu0 0.0
        %1106 = vmatpush1.msra.mxu0 0.0
        %1107 = vmatprep.subr.mxu0 0.0
        %1108 = vmatpush1.msra.mxu0 0.0
        %1109 = vmatprep.subr.mxu0 0.0
        %1110 = vmatpush1.msra.mxu0 0.0
        %1111 = vmatprep.subr.mxu0 0.0
        %1112 = vmatpush1.msra.mxu0 0.0
        %1113 = vmatprep.subr.mxu0 0.0
        %1114 = vmatpush1.msra.mxu0 0.0
        %1115 = vmatprep.subr.mxu0 0.0
        %1116 = vmatpush1.msra.mxu0 0.0
        %1117 = vmatprep.subr.mxu0 0.0
        %1118 = vmatpush1.msra.mxu0 0.0
        %1119 = vmatprep.subr.mxu0 0.0
        %1120 = vmatpush1.msra.mxu0 0.0
        %1121 = vmatprep.subr.mxu0 0.0
        %1122 = vmatpush1.msra.mxu0 0.0
        %1123 = vmatprep.subr.mxu0 0.0
        %1124 = vmatpush1.msra.mxu0 0.0
        %1125 = vmatprep.subr.mxu0 0.0
        %1126 = vmatpush1.msra.mxu0 0.0
        %1127 = vmatprep.subr.mxu0 0.0
        %1128 = vmatpush1.msra.mxu0 0.0
        %1129 = vmatprep.subr.mxu0 0.0
        %1130 = vmatpush1.msra.mxu0 0.0
        %1131 = vmatprep.subr.mxu0 0.0
        %1132 = vmatpush1.msra.mxu0 0.0
        %1133 = vmatprep.subr.mxu0 0.0
        %1134 = vmatpush1.msra.mxu0 0.0
        %1135 = vmatprep.subr.mxu0 0.0
        %1136 = vmatpush1.msra.mxu0 0.0
        %1137 = vmatprep.subr.mxu0 0.0
        %1138 = vmatpush1.msra.mxu0 0.0
        %1139 = vmatprep.subr.mxu0 0.0
        %1140 = vmatpush1.msra.mxu0 0.0
        %1141 = vmatprep.subr.mxu0 0.0
        %1142 = vmatpush1.msra.mxu0 0.0
        %1143 = vmatprep.subr.mxu0 0.0
        %1144 = vmatpush1.msra.mxu0 0.0
        %1145 = vmatprep.subr.mxu0 0.0
        %1146 = vmatpush1.msra.mxu0 0.0
        %1147 = vmatprep.subr.mxu0 0.0
        %1148 = vmatpush1.msra.mxu0 0.0
        %1149 = vmatprep.subr.mxu0 0.0
        %1150 = vmatpush1.msra.mxu0 0.0
        %1151 = vmatprep.subr.mxu0 0.0
        %1152 = vmatpush1.msra.mxu0 0.0
        %1153 = vmatprep.subr.mxu0 0.0
        %1154 = vmatpush1.msra.mxu0 0.0
        %1155 = vmatprep.subr.mxu0 0.0
        %1156 = vmatpush1.msra.mxu0 0.0
        %1157 = vmatprep.subr.mxu0 0.0
        %1158 = vmatpush1.msra.mxu0 0.0
        %1159 = vmatprep.subr.mxu0 0.0
        %1160 = vmatpush1.msra.mxu0 0.0
        %1161 = vmatprep.subr.mxu0 0.0
        %1162 = vmatpush1.msra.mxu0 0.0
        %1163 = vmatprep.mubr.f32.mxu0 0.0
        %1164 = vmatmul.mubr.f32.gmra.mrb[0].mxu0 %v1094
        %v1165 = vpop.f32.mrb[0].mxu0
        %v1166 = vadd.f32 0.0, %v1165
        %v1167 = vpop.f32.mrb[0].mxu0
        %1168 = vmatprep.mubr.f32.mxu0 0.0
        %1169 = vmatmul.mubr.f32.gmra.mrb[0].mxu0 %v1097
        %v1170 = vpop.f32.mrb[0].mxu0
        %v1171 = vadd.f32 0.0, %v1170
        %v1172 = vpop.f32.mrb[0].mxu0
        %1173 = vdwg.mxu0
        %v1174 = vsub.f32 %v355, %v1166
        %v1175 = vsub.f32 %v356, %v1171
        %1176 = vmatprep.subr.mxu0 0.0
        %1177 = vmatpush1.msra.mxu0 %v595
        %1178 = vmatprep.subr.mxu0 0.0
        %1179 = vmatpush1.msra.mxu0 %v601
        %1180 = vmatprep.subr.mxu0 0.0
        %1181 = vmatpush1.msra.mxu0 0.0
        %1182 = vmatprep.subr.mxu0 0.0
        %1183 = vmatpush1.msra.mxu0 0.0
        %1184 = vmatprep.subr.mxu0 0.0
        %1185 = vmatpush1.msra.mxu0 0.0
        %1186 = vmatprep.subr.mxu0 0.0
        %1187 = vmatpush1.msra.mxu0 0.0
        %1188 = vmatprep.subr.mxu0 0.0
        %1189 = vmatpush1.msra.mxu0 0.0
        %1190 = vmatprep.subr.mxu0 0.0
        %1191 = vmatpush1.msra.mxu0 0.0
        %1192 = vmatprep.subr.mxu0 0.0
        %1193 = vmatpush1.msra.mxu0 0.0
        %1194 = vmatprep.subr.mxu0 0.0
        %1195 = vmatpush1.msra.mxu0 0.0
        %1196 = vmatprep.subr.mxu0 0.0
        %1197 = vmatpush1.msra.mxu0 0.0
        %1198 = vmatprep.subr.mxu0 0.0
        %1199 = vmatpush1.msra.mxu0 0.0
        %1200 = vmatprep.subr.mxu0 0.0
        %1201 = vmatpush1.msra.mxu0 0.0
        %1202 = vmatprep.subr.mxu0 0.0
        %1203 = vmatpush1.msra.mxu0 0.0
        %1204 = vmatprep.subr.mxu0 0.0
        %1205 = vmatpush1.msra.mxu0 0.0
        %1206 = vmatprep.subr.mxu0 0.0
        %1207 = vmatpush1.msra.mxu0 0.0
        %1208 = vmatprep.subr.mxu0 0.0
        %1209 = vmatpush1.msra.mxu0 0.0
        %1210 = vmatprep.subr.mxu0 0.0
        %1211 = vmatpush1.msra.mxu0 0.0
        %1212 = vmatprep.subr.mxu0 0.0
        %1213 = vmatpush1.msra.mxu0 0.0
        %1214 = vmatprep.subr.mxu0 0.0
        %1215 = vmatpush1.msra.mxu0 0.0
        %1216 = vmatprep.subr.mxu0 0.0
        %1217 = vmatpush1.msra.mxu0 0.0
        %1218 = vmatprep.subr.mxu0 0.0
        %1219 = vmatpush1.msra.mxu0 0.0
        %1220 = vmatprep.subr.mxu0 0.0
        %1221 = vmatpush1.msra.mxu0 0.0
        %1222 = vmatprep.subr.mxu0 0.0
        %1223 = vmatpush1.msra.mxu0 0.0
        %1224 = vmatprep.subr.mxu0 0.0
        %1225 = vmatpush1.msra.mxu0 0.0
        %1226 = vmatprep.subr.mxu0 0.0
        %1227 = vmatpush1.msra.mxu0 0.0
        %1228 = vmatprep.subr.mxu0 0.0
        %1229 = vmatpush1.msra.mxu0 0.0
        %1230 = vmatprep.subr.mxu0 0.0
        %1231 = vmatpush1.msra.mxu0 0.0
        %1232 = vmatprep.subr.mxu0 0.0
        %1233 = vmatpush1.msra.mxu0 0.0
        %1234 = vmatprep.subr.mxu0 0.0
        %1235 = vmatpush1.msra.mxu0 0.0
        %1236 = vmatprep.subr.mxu0 0.0
        %1237 = vmatpush1.msra.mxu0 0.0
        %1238 = vmatprep.subr.mxu0 0.0
        %1239 = vmatpush1.msra.mxu0 0.0
        %1240 = vmatprep.mubr.f32.mxu0 0.0
        %1241 = vmatmul.mubr.f32.gmra.mrb[0].mxu0 %v1094
        %v1242 = vpop.f32.mrb[0].mxu0
        %v1243 = vadd.f32 0.0, %v1242
        %v1244 = vpop.f32.mrb[0].mxu0
        %1245 = vmatprep.mubr.f32.mxu0 0.0
        %1246 = vmatmul.mubr.f32.gmra.mrb[0].mxu0 %v1097
        %v1247 = vpop.f32.mrb[0].mxu0
        %v1248 = vadd.f32 0.0, %v1247
        %v1249 = vpop.f32.mrb[0].mxu0
        %1250 = vdwg.mxu0
        %v1251 = vsub.f32 %v357, %v1243
        %v1252 = vsub.f32 %v358, %v1248
        %1253 = vmatprep.subr.mxu0 0.0
        %1254 = vmatpush1.msra.mxu0 %v753
        %1255 = vmatprep.subr.mxu0 0.0
        %1256 = vmatpush1.msra.mxu0 %v759
        %1257 = vmatprep.subr.mxu0 0.0
        %1258 = vmatpush1.msra.mxu0 0.0
        %1259 = vmatprep.subr.mxu0 0.0
        %1260 = vmatpush1.msra.mxu0 0.0
        %1261 = vmatprep.subr.mxu0 0.0
        %1262 = vmatpush1.msra.mxu0 0.0
        %1263 = vmatprep.subr.mxu0 0.0
        %1264 = vmatpush1.msra.mxu0 0.0
        %1265 = vmatprep.subr.mxu0 0.0
        %1266 = vmatpush1.msra.mxu0 0.0
        %1267 = vmatprep.subr.mxu0 0.0
        %1268 = vmatpush1.msra.mxu0 0.0
        %1269 = vmatprep.subr.mxu0 0.0
        %1270 = vmatpush1.msra.mxu0 0.0
        %1271 = vmatprep.subr.mxu0 0.0
        %1272 = vmatpush1.msra.mxu0 0.0
        %1273 = vmatprep.subr.mxu0 0.0
        %1274 = vmatpush1.msra.mxu0 0.0
        %1275 = vmatprep.subr.mxu0 0.0
        %1276 = vmatpush1.msra.mxu0 0.0
        %1277 = vmatprep.subr.mxu0 0.0
        %1278 = vmatpush1.msra.mxu0 0.0
        %1279 = vmatprep.subr.mxu0 0.0
        %1280 = vmatpush1.msra.mxu0 0.0
        %1281 = vmatprep.subr.mxu0 0.0
        %1282 = vmatpush1.msra.mxu0 0.0
        %1283 = vmatprep.subr.mxu0 0.0
        %1284 = vmatpush1.msra.mxu0 0.0
        %1285 = vmatprep.subr.mxu0 0.0
        %1286 = vmatpush1.msra.mxu0 0.0
        %1287 = vmatprep.subr.mxu0 0.0
        %1288 = vmatpush1.msra.mxu0 0.0
        %1289 = vmatprep.subr.mxu0 0.0
        %1290 = vmatpush1.msra.mxu0 0.0
        %1291 = vmatprep.subr.mxu0 0.0
        %1292 = vmatpush1.msra.mxu0 0.0
        %1293 = vmatprep.subr.mxu0 0.0
        %1294 = vmatpush1.msra.mxu0 0.0
        %1295 = vmatprep.subr.mxu0 0.0
        %1296 = vmatpush1.msra.mxu0 0.0
        %1297 = vmatprep.subr.mxu0 0.0
        %1298 = vmatpush1.msra.mxu0 0.0
        %1299 = vmatprep.subr.mxu0 0.0
        %1300 = vmatpush1.msra.mxu0 0.0
        %1301 = vmatprep.subr.mxu0 0.0
        %1302 = vmatpush1.msra.mxu0 0.0
        %1303 = vmatprep.subr.mxu0 0.0
        %1304 = vmatpush1.msra.mxu0 0.0
        %1305 = vmatprep.subr.mxu0 0.0
        %1306 = vmatpush1.msra.mxu0 0.0
        %1307 = vmatprep.subr.mxu0 0.0
        %1308 = vmatpush1.msra.mxu0 0.0
        %1309 = vmatprep.subr.mxu0 0.0
        %1310 = vmatpush1.msra.mxu0 0.0
        %1311 = vmatprep.subr.mxu0 0.0
        %1312 = vmatpush1.msra.mxu0 0.0
        %1313 = vmatprep.subr.mxu0 0.0
        %1314 = vmatpush1.msra.mxu0 0.0
        %1315 = vmatprep.subr.mxu0 0.0
        %1316 = vmatpush1.msra.mxu0 0.0
        %1317 = vmatprep.mubr.f32.mxu0 0.0
        %1318 = vmatmul.mubr.f32.gmra.mrb[0].mxu0 %v1094
        %v1319 = vpop.f32.mrb[0].mxu0
        %v1320 = vadd.f32 0.0, %v1319
        %v1321 = vpop.f32.mrb[0].mxu0
        %1322 = vmatprep.mubr.f32.mxu0 0.0
        %1323 = vmatmul.mubr.f32.gmra.mrb[0].mxu0 %v1097
        %v1324 = vpop.f32.mrb[0].mxu0
        %v1325 = vadd.f32 0.0, %v1324
        %v1326 = vpop.f32.mrb[0].mxu0
        %1327 = vdwg.mxu0
        %v1328 = vsub.f32 %v359, %v1320
        %v1329 = vsub.f32 %v360, %v1325
        %v1330 = vmax.f32 %v1251, %v1328
        %v1331 = vmax.f32 %v1252, %v1329
        %v1332 = vsub.f32 %v1174, %v1330
        %v1333 = vsub.f32 %v1175, %v1331
        %v1334 = vand.u32 2147483647, %v1332
        %v1335 = vand.u32 2147483647, %v1333
        %v1336 = vsel %vm361, %v1334, 0.0
        %v1337 = vsel %vm361, %v1335, 0.0
        %v1338 = vadd.f32 %v1336, %v1337
        %v1339 = vrot.slane %v1338, 4
        %v1340 = vadd.f32 %v1338, %v1339
        %v1341 = vrot.slane %v1340, 2
        %v1342 = vadd.f32 %v1340, %v1341
        %v1343 = vrot.slane %v1342, 1
        %v1344 = vadd.f32 %v1342, %v1343
        %s1345 = scalar_lea.vmem [#allocation9], 32
        %v1346 = vld [vmem:[%s1345] sm:$0xff]
        %v1347 = vld [vmem:[%s1345 + $0x8] sm:$0xff]
        %v1349 = vsel %vm361, %v1346, 0
        %v1352 = vsel %vm361, %v1347, 0
        %1354 = vmatprep.subr.mxu0 0.0
        %1355 = vmatpush1.msra.mxu0 %v512
        %1356 = vmatprep.subr.mxu0 0.0
        %1357 = vmatpush1.msra.mxu0 %v517
        %1358 = vmatprep.subr.mxu0 0.0
        %1359 = vmatpush1.msra.mxu0 0.0
        %1360 = vmatprep.subr.mxu0 0.0
        %1361 = vmatpush1.msra.mxu0 0.0
        %1362 = vmatprep.subr.mxu0 0.0
        %1363 = vmatpush1.msra.mxu0 0.0
        %1364 = vmatprep.subr.mxu0 0.0
        %1365 = vmatpush1.msra.mxu0 0.0
        %1366 = vmatprep.subr.mxu0 0.0
        %1367 = vmatpush1.msra.mxu0 0.0
        %1368 = vmatprep.subr.mxu0 0.0
        %1369 = vmatpush1.msra.mxu0 0.0
        %1370 = vmatprep.subr.mxu0 0.0
        %1371 = vmatpush1.msra.mxu0 0.0
        %1372 = vmatprep.subr.mxu0 0.0
        %1373 = vmatpush1.msra.mxu0 0.0
        %1374 = vmatprep.subr.mxu0 0.0
        %1375 = vmatpush1.msra.mxu0 0.0
        %1376 = vmatprep.subr.mxu0 0.0
        %1377 = vmatpush1.msra.mxu0 0.0
        %1378 = vmatprep.subr.mxu0 0.0
        %1379 = vmatpush1.msra.mxu0 0.0
        %1380 = vmatprep.subr.mxu0 0.0
        %1381 = vmatpush1.msra.mxu0 0.0
        %1382 = vmatprep.subr.mxu0 0.0
        %1383 = vmatpush1.msra.mxu0 0.0
        %1384 = vmatprep.subr.mxu0 0.0
        %1385 = vmatpush1.msra.mxu0 0.0
        %1386 = vmatprep.subr.mxu0 0.0
        %1387 = vmatpush1.msra.mxu0 0.0
        %1388 = vmatprep.subr.mxu0 0.0
        %1389 = vmatpush1.msra.mxu0 0.0
        %1390 = vmatprep.subr.mxu0 0.0
        %1391 = vmatpush1.msra.mxu0 0.0
        %1392 = vmatprep.subr.mxu0 0.0
        %1393 = vmatpush1.msra.mxu0 0.0
        %1394 = vmatprep.subr.mxu0 0.0
        %1395 = vmatpush1.msra.mxu0 0.0
        %1396 = vmatprep.subr.mxu0 0.0
        %1397 = vmatpush1.msra.mxu0 0.0
        %1398 = vmatprep.subr.mxu0 0.0
        %1399 = vmatpush1.msra.mxu0 0.0
        %1400 = vmatprep.subr.mxu0 0.0
        %1401 = vmatpush1.msra.mxu0 0.0
        %1402 = vmatprep.subr.mxu0 0.0
        %1403 = vmatpush1.msra.mxu0 0.0
        %1404 = vmatprep.subr.mxu0 0.0
        %1405 = vmatpush1.msra.mxu0 0.0
        %1406 = vmatprep.subr.mxu0 0.0
        %1407 = vmatpush1.msra.mxu0 0.0
        %1408 = vmatprep.subr.mxu0 0.0
        %1409 = vmatpush1.msra.mxu0 0.0
        %1410 = vmatprep.subr.mxu0 0.0
        %1411 = vmatpush1.msra.mxu0 0.0
        %1412 = vmatprep.subr.mxu0 0.0
        %1413 = vmatpush1.msra.mxu0 0.0
        %1414 = vmatprep.subr.mxu0 0.0
        %1415 = vmatpush1.msra.mxu0 0.0
        %1416 = vmatprep.subr.mxu0 0.0
        %1417 = vmatpush1.msra.mxu0 0.0
        %1418 = vmatprep.mubr.f32.mxu0 0.0
        %1419 = vmatmul.mubr.f32.gmra.mrb[0].mxu0 %v1349
        %v1420 = vpop.f32.mrb[0].mxu0
        %v1421 = vadd.f32 0.0, %v1420
        %v1422 = vpop.f32.mrb[0].mxu0
        %1423 = vmatprep.mubr.f32.mxu0 0.0
        %1424 = vmatmul.mubr.f32.gmra.mrb[0].mxu0 %v1352
        %v1425 = vpop.f32.mrb[0].mxu0
        %v1426 = vadd.f32 0.0, %v1425
        %v1427 = vpop.f32.mrb[0].mxu0
        %1428 = vdwg.mxu0
        %v1429 = vsub.f32 %v355, %v1421
        %v1430 = vsub.f32 %v356, %v1426
        %1431 = vmatprep.subr.mxu0 0.0
        %1432 = vmatpush1.msra.mxu0 %v670
        %1433 = vmatprep.subr.mxu0 0.0
        %1434 = vmatpush1.msra.mxu0 %v675
        %1435 = vmatprep.subr.mxu0 0.0
        %1436 = vmatpush1.msra.mxu0 0.0
        %1437 = vmatprep.subr.mxu0 0.0
        %1438 = vmatpush1.msra.mxu0 0.0
        %1439 = vmatprep.subr.mxu0 0.0
        %1440 = vmatpush1.msra.mxu0 0.0
        %1441 = vmatprep.subr.mxu0 0.0
        %1442 = vmatpush1.msra.mxu0 0.0
        %1443 = vmatprep.subr.mxu0 0.0
        %1444 = vmatpush1.msra.mxu0 0.0
        %1445 = vmatprep.subr.mxu0 0.0
        %1446 = vmatpush1.msra.mxu0 0.0
        %1447 = vmatprep.subr.mxu0 0.0
        %1448 = vmatpush1.msra.mxu0 0.0
        %1449 = vmatprep.subr.mxu0 0.0
        %1450 = vmatpush1.msra.mxu0 0.0
        %1451 = vmatprep.subr.mxu0 0.0
        %1452 = vmatpush1.msra.mxu0 0.0
        %1453 = vmatprep.subr.mxu0 0.0
        %1454 = vmatpush1.msra.mxu0 0.0
        %1455 = vmatprep.subr.mxu0 0.0
        %1456 = vmatpush1.msra.mxu0 0.0
        %1457 = vmatprep.subr.mxu0 0.0
        %1458 = vmatpush1.msra.mxu0 0.0
        %1459 = vmatprep.subr.mxu0 0.0
        %1460 = vmatpush1.msra.mxu0 0.0
        %1461 = vmatprep.subr.mxu0 0.0
        %1462 = vmatpush1.msra.mxu0 0.0
        %1463 = vmatprep.subr.mxu0 0.0
        %1464 = vmatpush1.msra.mxu0 0.0
        %1465 = vmatprep.subr.mxu0 0.0
        %1466 = vmatpush1.msra.mxu0 0.0
        %1467 = vmatprep.subr.mxu0 0.0
        %1468 = vmatpush1.msra.mxu0 0.0
        %1469 = vmatprep.subr.mxu0 0.0
        %1470 = vmatpush1.msra.mxu0 0.0
        %1471 = vmatprep.subr.mxu0 0.0
        %1472 = vmatpush1.msra.mxu0 0.0
        %1473 = vmatprep.subr.mxu0 0.0
        %1474 = vmatpush1.msra.mxu0 0.0
        %1475 = vmatprep.subr.mxu0 0.0
        %1476 = vmatpush1.msra.mxu0 0.0
        %1477 = vmatprep.subr.mxu0 0.0
        %1478 = vmatpush1.msra.mxu0 0.0
        %1479 = vmatprep.subr.mxu0 0.0
        %1480 = vmatpush1.msra.mxu0 0.0
        %1481 = vmatprep.subr.mxu0 0.0
        %1482 = vmatpush1.msra.mxu0 0.0
        %1483 = vmatprep.subr.mxu0 0.0
        %1484 = vmatpush1.msra.mxu0 0.0
        %1485 = vmatprep.subr.mxu0 0.0
        %1486 = vmatpush1.msra.mxu0 0.0
        %1487 = vmatprep.subr.mxu0 0.0
        %1488 = vmatpush1.msra.mxu0 0.0
        %1489 = vmatprep.subr.mxu0 0.0
        %1490 = vmatpush1.msra.mxu0 0.0
        %1491 = vmatprep.subr.mxu0 0.0
        %1492 = vmatpush1.msra.mxu0 0.0
        %1493 = vmatprep.subr.mxu0 0.0
        %1494 = vmatpush1.msra.mxu0 0.0
        %1495 = vmatprep.mubr.f32.mxu0 0.0
        %1496 = vmatmul.mubr.f32.gmra.mrb[0].mxu0 %v1349
        %v1497 = vpop.f32.mrb[0].mxu0
        %v1498 = vadd.f32 0.0, %v1497
        %v1499 = vpop.f32.mrb[0].mxu0
        %1500 = vmatprep.mubr.f32.mxu0 0.0
        %1501 = vmatmul.mubr.f32.gmra.mrb[0].mxu0 %v1352
        %v1502 = vpop.f32.mrb[0].mxu0
        %v1503 = vadd.f32 0.0, %v1502
        %v1504 = vpop.f32.mrb[0].mxu0
        %1505 = vdwg.mxu0
        %v1506 = vsub.f32 %v357, %v1498
        %v1507 = vsub.f32 %v358, %v1503
        %1508 = vmatprep.subr.mxu0 0.0
        %1509 = vmatpush1.msra.mxu0 %v828
        %1510 = vmatprep.subr.mxu0 0.0
        %1511 = vmatpush1.msra.mxu0 %v833
        %1512 = vmatprep.subr.mxu0 0.0
        %1513 = vmatpush1.msra.mxu0 0.0
        %1514 = vmatprep.subr.mxu0 0.0
        %1515 = vmatpush1.msra.mxu0 0.0
        %1516 = vmatprep.subr.mxu0 0.0
        %1517 = vmatpush1.msra.mxu0 0.0
        %1518 = vmatprep.subr.mxu0 0.0
        %1519 = vmatpush1.msra.mxu0 0.0
        %1520 = vmatprep.subr.mxu0 0.0
        %1521 = vmatpush1.msra.mxu0 0.0
        %1522 = vmatprep.subr.mxu0 0.0
        %1523 = vmatpush1.msra.mxu0 0.0
        %1524 = vmatprep.subr.mxu0 0.0
        %1525 = vmatpush1.msra.mxu0 0.0
        %1526 = vmatprep.subr.mxu0 0.0
        %1527 = vmatpush1.msra.mxu0 0.0
        %1528 = vmatprep.subr.mxu0 0.0
        %1529 = vmatpush1.msra.mxu0 0.0
        %1530 = vmatprep.subr.mxu0 0.0
        %1531 = vmatpush1.msra.mxu0 0.0
        %1532 = vmatprep.subr.mxu0 0.0
        %1533 = vmatpush1.msra.mxu0 0.0
        %1534 = vmatprep.subr.mxu0 0.0
        %1535 = vmatpush1.msra.mxu0 0.0
        %1536 = vmatprep.subr.mxu0 0.0
        %1537 = vmatpush1.msra.mxu0 0.0
        %1538 = vmatprep.subr.mxu0 0.0
        %1539 = vmatpush1.msra.mxu0 0.0
        %1540 = vmatprep.subr.mxu0 0.0
        %1541 = vmatpush1.msra.mxu0 0.0
        %1542 = vmatprep.subr.mxu0 0.0
        %1543 = vmatpush1.msra.mxu0 0.0
        %1544 = vmatprep.subr.mxu0 0.0
        %1545 = vmatpush1.msra.mxu0 0.0
        %1546 = vmatprep.subr.mxu0 0.0
        %1547 = vmatpush1.msra.mxu0 0.0
        %1548 = vmatprep.subr.mxu0 0.0
        %1549 = vmatpush1.msra.mxu0 0.0
        %1550 = vmatprep.subr.mxu0 0.0
        %1551 = vmatpush1.msra.mxu0 0.0
        %1552 = vmatprep.subr.mxu0 0.0
        %1553 = vmatpush1.msra.mxu0 0.0
        %1554 = vmatprep.subr.mxu0 0.0
        %1555 = vmatpush1.msra.mxu0 0.0
        %1556 = vmatprep.subr.mxu0 0.0
        %1557 = vmatpush1.msra.mxu0 0.0
        %1558 = vmatprep.subr.mxu0 0.0
        %1559 = vmatpush1.msra.mxu0 0.0
        %1560 = vmatprep.subr.mxu0 0.0
        %1561 = vmatpush1.msra.mxu0 0.0
        %1562 = vmatprep.subr.mxu0 0.0
        %1563 = vmatpush1.msra.mxu0 0.0
        %1564 = vmatprep.subr.mxu0 0.0
        %1565 = vmatpush1.msra.mxu0 0.0
        %1566 = vmatprep.subr.mxu0 0.0
        %1567 = vmatpush1.msra.mxu0 0.0
        %1568 = vmatprep.subr.mxu0 0.0
        %1569 = vmatpush1.msra.mxu0 0.0
        %1570 = vmatprep.subr.mxu0 0.0
        %1571 = vmatpush1.msra.mxu0 0.0
        %1572 = vmatprep.mubr.f32.mxu0 0.0
        %1573 = vmatmul.mubr.f32.gmra.mrb[0].mxu0 %v1349
        %v1574 = vpop.f32.mrb[0].mxu0
        %v1575 = vadd.f32 0.0, %v1574
        %v1576 = vpop.f32.mrb[0].mxu0
        %1577 = vmatprep.mubr.f32.mxu0 0.0
        %1578 = vmatmul.mubr.f32.gmra.mrb[0].mxu0 %v1352
        %v1579 = vpop.f32.mrb[0].mxu0
        %v1580 = vadd.f32 0.0, %v1579
        %v1581 = vpop.f32.mrb[0].mxu0
        %1582 = vdwg.mxu0
        %v1583 = vsub.f32 %v359, %v1575
        %v1584 = vsub.f32 %v360, %v1580
        %v1585 = vmax.f32 %v1506, %v1583
        %v1586 = vmax.f32 %v1507, %v1584
        %v1587 = vsub.f32 %v1429, %v1585
        %v1588 = vsub.f32 %v1430, %v1586
        %v1589 = vand.u32 2147483647, %v1587
        %v1590 = vand.u32 2147483647, %v1588
        %v1591 = vsel %vm361, %v1589, 0.0
        %v1592 = vsel %vm361, %v1590, 0.0
        %v1593 = vadd.f32 %v1591, %v1592
        %v1594 = vrot.slane %v1593, 4
        %v1595 = vadd.f32 %v1593, %v1594
        %v1596 = vrot.slane %v1595, 2
        %v1597 = vadd.f32 %v1595, %v1596
        %v1598 = vrot.slane %v1597, 1
        %v1599 = vadd.f32 %v1597, %v1598
        %vm1600 = vcmask 1040384
        %v1601 = vsel %vm1600, %v1089, %v1344
        %vm1602 = vcmask 1041408
        %v1603 = vsel %vm1602, %v1601, %v1599
        %vm1604 = vcmask 124928
        %1605 = vst.msk [vmem:[%s348] sm:$0x7] %vm1604, %v1603
        %p1606 = scmp.lt.s32.totalorder %s23, 1
        %s1607 = scalar_select %p1606, %s23, 1
        %s1608 = smul.addr %s1607, 4
        %s1609 = scalar_lea.vmem %s5, %s1608
        // Predicated region
        $region61: #{lap_loss2.1} parent=39 // pred_check
          %p1610 = pneg %p161
        $region62: #{lap_loss2.1} parent=39 // pred_check_branch
          %1612 = sbr.rel (%p1610) target = $region64
        $region63: #{lap_loss2.1} parent=39 // pred_region
          _
        $region64: #{lap_loss2.1} parent=39 // pred_fallthru
          _
      $region40: #{lap_loss2.1} parent=5 // pred_fallthru
        _
      %p1613 = scmp.le.s32.totalorder 2, %s18
      // Predicated region
      $region65: #{lap_loss2.1} parent=5 // pred_check
        %p1614 = pneg %p1613
      $region66: #{lap_loss2.1} parent=5 // pred_check_branch
        %1616 = sbr.rel (%p1614) target = $region68
      $region67: #{lap_loss2.1} parent=5 // pred_region
        %s1617 = ssub.s32 %s18, 2
        // Predicated region
        $region69: #{lap_loss2.1} parent=67 // pred_check
          %p1618 = pneg %p167
        $region70: #{lap_loss2.1} parent=67 // pred_check_branch
          %1620 = sbr.rel (%p1618) target = $region72
        $region71: #{lap_loss2.1} parent=67 // pred_region
          %p1621 = scmp.lt.s32.totalorder %s24, 1
          %s1622 = scalar_select %p1621, %s24, 1
          %s1623 = smul.addr %s1622, 4
          %s1624 = scalar_lea.vmem %s5, %s1623
        $region72: #{lap_loss2.1} parent=67 // pred_fallthru
          _
      $region68: #{lap_loss2.1} parent=5 // pred_fallthru
        _
    $region6: #{lap_loss2.1} parent=1 // loop_footer
      %s22 = sadd.s32 1, %s18
    $region7: #{lap_loss2.1} parent=1 // loop_footer_branch
      %17 = sbr.rel target = $region3
    $region8: #{lap_loss2.1} parent=1 // loop_exit
      _
    %1625 = vsyncpa [#allocation3], 1
    %s1626 = scalar_lea.sflag [#allocation3], 1
    %1627 = vsyncpa %s1626, 1
    %1628 = vsyncpa [#allocation5], 1
    %s1629 = scalar_lea.sflag [#allocation5], 1
    %1630 = vsyncpa %s1629, 1
    %1631 = vsyncpa [#allocation8], 1

</llo_original>
